<compile_context>
chip_gen: v5e
topology: v5e:2x2
jax: 0.10.0
libtpu: 0.0.40
codegen_flags: <defaults>
</compile_context>

<pallas_src>
import math
import numpy as np
import jax
import jax.numpy as jnp
from jax import lax
from jax.experimental import pallas as pl
from jax.experimental.pallas import tpu as pltpu

# ----------------------- configuration (Deconv hyper-params) -------------------
B = 2
CHANNELS = 4
H = W = 16
HW = H * W                                 # 256 = 2 x 128 lanes (dense)
LOG2W = W.bit_length() - 1
GROUPS = 2
RATIO = 1.0
KH = KW = 3
PH, PW = KH // 2, KW // 2
CG = CHANNELS // GROUPS                    # in-channels per group        = 2
S = round(CHANNELS * RATIO / GROUPS)       # source channels per group    = 2
GS = GROUPS * S                            # Linear output channels       = 4
NT = KH * KW                               # taps per 3x3 stencil         = 9
TAPS = [(di, dj) for di in range(KH) for dj in range(KW)]
NUM_ITERS = 1
EPS = 1e-16

assert S == 2 and CG == 2 and GS == CHANNELS      # pair-swap packing assumes this
assert (W & (W - 1)) == 0 and (H & (H - 1)) == 0  # bitwise row/col index math
assert (CHANNELS & (CHANNELS - 1)) == 0

# TODO(synk): update_filter=True (update_h / sconv) path is inactive under the
#             default config and is not implemented here.


# ------------------------- wrapper-side weight arrangement ----------------------
def _build_h_cols(h0, bn):
    """Arrange raw h0 into per-sublane weight columns (relu applied in-kernel).

    Returns (bn*CHANNELS, 4*NT) with column blocks, tap-major t = di*KW + dj:
      [0*NT:1*NT)  x_hat conv, 'same'  stack:  h[g*CG+ch, ch,    di, dj]
      [1*NT:2*NT)  x_hat conv, 'swap'  stack:  h[g*CG+ch, 1-ch,  di, dj]
      [2*NT:3*NT)  num/den conv, 'same':       h[g*CG+ch,   ch,  flip(di,dj)]
      [3*NT:4*NT)  num/den conv, 'swap':       h[g*CG+1-ch, ch,  flip(di,dj)]
    """
    a0, a1, a2, a3 = [], [], [], []
    for c in range(CHANNELS):
        g, ch = divmod(c, CG)
        row = []
        for di, dj in TAPS:
            row.append((g * CG + ch, ch, di, dj))
        for di, dj in TAPS:
            row.append((g * CG + ch, 1 - ch, di, dj))
        for di, dj in TAPS:
            row.append((g * CG + ch, ch, KH - 1 - di, KW - 1 - dj))
        for di, dj in TAPS:
            row.append((g * CG + (1 - ch), ch, KH - 1 - di, KW - 1 - dj))
        a0.append([t[0] for t in row]); a1.append([t[1] for t in row])
        a2.append([t[2] for t in row]); a3.append([t[3] for t in row])
    idx = tuple(np.asarray(a) for a in (a0, a1, a2, a3))
    base = h0[idx]                          # (CHANNELS, 4*NT) gather of raw h0
    return jnp.tile(base, (bn, 1))          # (bn*CHANNELS, 4*NT)


def _build_lin_cols(w_lin, b_lin, bn):
    """Linear weights arranged for the sublane-rolled formulation.

    Column j (j=0..CHANNELS-1) at row (b, o): w_lin[o, (o-j) % CHANNELS];
    last column: bias b_lin[o].  Shape (bn*GS, CHANNELS+1)."""
    o_idx = np.arange(GS)[:, None]
    j_idx = np.arange(CHANNELS)[None, :]
    c_idx = (o_idx - j_idx) % CHANNELS                     # (GS, CHANNELS)
    w_cols = jnp.take_along_axis(w_lin, jnp.asarray(c_idx), axis=1)
    base = jnp.concatenate([w_cols, b_lin[:, None]], axis=1)   # (GS, CHANNELS+1)
    return jnp.tile(base, (bn, 1))


# --------------------------- fused forward kernel -------------------------------
def _deconv_fused_kernel(x_ref, hcol_ref, lin_ref, out_ref):
    # x_ref   : VMEM (B*CHANNELS, HW)      input planes, spatial flat in lanes
    # hcol_ref: VMEM (B*CHANNELS, 4*NT)    raw h0 arranged (relu in-kernel)
    # lin_ref : VMEM (B*GS, CHANNELS+1)    Linear weight columns + bias column
    # out_ref : VMEM (B*GS, HW)            updated source estimate
    nrows = x_ref.shape[0]

    # --- per-lane 'same'-padding validity masks (bitwise index math) ---
    lane = lax.broadcasted_iota(jnp.int32, (1, HW), 1)
    col = lane & (W - 1)
    row = (lane >> LOG2W) & (H - 1)
    masks = {}
    for di, dj in TAPS:
        ri, rj = di - PH, dj - PW
        if ri == 0 and rj == 0:
            masks[(di, dj)] = None                 # center tap: always valid
        else:
            ok = ((col + rj >= 0) & (col + rj < W) &
                  (row + ri >= 0) & (row + ri < H))
            masks[(di, dj)] = ok.astype(jnp.float32)

    # --- per-sublane index helpers ---
    sub = lax.broadcasted_iota(jnp.int32, (nrows, 1), 0)
    blk = sub & (CHANNELS - 1)                     # channel index within batch block
    even = (sub & 1) == 0                          # parity within a (ci=0, ci=1) pair

    def rollsub(a, k):                             # out[r] = a[(r - k) mod nrows]
        k = k % nrows
        return a if k == 0 else pltpu.roll(a, k, 0)

    def pair_swap(a):                              # swap rows within channel pairs
        return jnp.where(even, rollsub(a, nrows - 1), rollsub(a, 1))

    def lane_shift(a, di, dj):                     # per-row 'same' stencil shift
        k = (di - PH) * W + (dj - PW)
        return a if k == 0 else pltpu.roll(a, (-k) % HW, 1)

    x = x_ref[...]                                 # (8, 256)
    lin = lin_ref[...]                             # (8, CHANNELS+1)
    hcol = jnp.maximum(hcol_ref[...], 0.0)         # relu(h0), arranged columns

    # ---------------- Initializer (fused): s = relu(Linear(x)) ----------------
    s = x * lin[:, 0:1] + lin[:, CHANNELS:CHANNELS + 1]
    for j in range(1, CHANNELS):
        xj = jnp.where(blk >= j, rollsub(x, j), rollsub(x, j - CHANNELS))
        s = s + xj * lin[:, j:j + 1]
    s = jnp.maximum(s, 0.0)

    # ---------------- multiplicative source update (per group, packed) --------
    x_sw = pair_swap(x)
    for _ in range(NUM_ITERS):
        s_sw = pair_swap(s)

        # x_hat = conv(s, h)
        xhat = None
        for t, (di, dj) in enumerate(TAPS):
            part = (lane_shift(s, di, dj) * hcol[:, t:t + 1]
                    + lane_shift(s_sw, di, dj) * hcol[:, NT + t:NT + t + 1])
            m = masks[(di, dj)]
            if m is not None:
                part = part * m
            xhat = part if xhat is None else xhat + part

        # numerator = conv(x, t(flip(h))), denominator = conv(x_hat, t(flip(h)))
        xhat_sw = pair_swap(xhat)
        num = None
        den = None
        for t, (di, dj) in enumerate(TAPS):
            ws = hcol[:, 2 * NT + t:2 * NT + t + 1]
            ww = hcol[:, 3 * NT + t:3 * NT + t + 1]
            pn = lane_shift(x, di, dj) * ws + lane_shift(x_sw, di, dj) * ww
            pd = lane_shift(xhat, di, dj) * ws + lane_shift(xhat_sw, di, dj) * ww
            m = masks[(di, dj)]
            if m is not None:
                pn = pn * m
                pd = pd * m
            num = pn if num is None else num + pn
            den = pd if den is None else den + pd

        # s <- s * (num + eps) / (den + eps)   (exact division)
        s = s * (num + EPS) / (den + EPS)

    out_ref[...] = s                               # dense (8, 256) store


def _deconv_forward_impl(x, h0, w_lin, b_lin):
    bn = x.shape[0]
    x_stack = x.reshape(bn * CHANNELS, HW)
    hcols = _build_h_cols(h0, bn)
    lincols = _build_lin_cols(w_lin, b_lin, bn)
    out = pl.pallas_call(
        _deconv_fused_kernel,
        out_shape=jax.ShapeDtypeStruct((bn * GS, HW), jnp.float32),
        in_specs=[pl.BlockSpec(memory_space=pltpu.MemorySpace.VMEM)] * 3,
        out_specs=pl.BlockSpec(memory_space=pltpu.MemorySpace.VMEM),
    )(x_stack, hcols, lincols)
    return out.reshape(bn, GS, H, W)


deconv_forward = jax.jit(_deconv_forward_impl)


# ------------------------------ pure-JAX reference ------------------------------
def _ref_conv(x, h):
    # x: (N, Cin, H, W), h: (N, Cout, Cin, KH, KW) -> (N, Cout, H, W)
    def one(xi, hi):
        return lax.conv_general_dilated(
            xi[None], hi, (1, 1), [(PH, PH), (PW, PW)],
            dimension_numbers=("NCHW", "OIHW", "NCHW"),
            precision=lax.Precision.HIGHEST)[0]
    return jax.vmap(one)(x, h)


def _ref_forward(x, h0, w_lin, b_lin):
    bn = x.shape[0]
    s = jnp.einsum("bchw,oc->bohw", x, w_lin,
                   precision=lax.Precision.HIGHEST) + b_lin[None, :, None, None]
    s = jnp.maximum(s, 0.0)
    h = jnp.maximum(h0, 0.0)
    h = jnp.broadcast_to(h[None], (bn,) + h.shape)
    xg = x.reshape(bn * GROUPS, CG, H, W)
    sg = s.reshape(bn * GROUPS, S, H, W)
    hg = h.reshape(bn * GROUPS, CG, S, KH, KW)
    for _ in range(NUM_ITERS):
        ht = jnp.flip(hg, axis=(-2, -1)).transpose(0, 2, 1, 3, 4)   # t(flip(h))
        num = _ref_conv(xg, ht) + EPS
        den = _ref_conv(_ref_conv(sg, hg), ht) + EPS
        sg = sg * num / den
    return sg.reshape(bn, GS, H, W)


# ------------------------------------ main ---------------------------------------
if __name__ == "__main__":
    key = jax.random.PRNGKey(0)
    k1, k2, k3, k4 = jax.random.split(key, 4)

    # h0: kaiming_uniform_(a=sqrt(5)) => U(-1/sqrt(fan_in), 1/sqrt(fan_in))
    fan_in_h = S * KH * KW
    bound_h = 1.0 / math.sqrt(fan_in_h)
    h0 = jax.random.uniform(k1, (CHANNELS, S, KH, KW), jnp.float32, -bound_h, bound_h)

    # Linear(channels, groups*source_channels): pointwise channel linear + bias
    bound_l = 1.0 / math.sqrt(CHANNELS)
    w_lin = jax.random.uniform(k2, (GS, CHANNELS), jnp.float32, -bound_l, bound_l)
    b_lin = jax.random.uniform(k3, (GS,), jnp.float32, 0.1, 0.6)

    # non-negative input keeps the multiplicative update well-conditioned
    x = jax.random.uniform(k4, (B, CHANNELS, H, W), jnp.float32, 0.05, 1.0)

    out = jax.block_until_ready(deconv_forward(x, h0, w_lin, b_lin))
    ref = jax.block_until_ready(_ref_forward(x, h0, w_lin, b_lin))

    assert out.shape == (B, GS, H, W)
    np.testing.assert_allclose(np.asarray(out), np.asarray(ref), rtol=1e-4, atol=1e-6)
    print("KERNEL_OK")
</pallas_src>

<mosaic_0001>
module attributes {stable_mosaic.version = 11 : i64} {
  func.func @_deconv_fused_kernel(%arg0: memref<8x256xf32, #tpu.memory_space<vmem>>, %arg1: memref<8x36xf32, #tpu.memory_space<vmem>>, %arg2: memref<8x5xf32, #tpu.memory_space<vmem>>, %arg3: memref<8x256xf32, #tpu.memory_space<vmem>>) attributes {dimension_semantics = [], scalar_prefetch = 0 : i64, scratch_operands = 0 : i64, tpu.core_type = #tpu.core_type<tc>} {
    %0 = tpu.iota {dimensions = array<i32: 1>} : vector<1x256xi32>
    %c15_i32 = arith.constant 15 : i32
    %1 = vector.broadcast %c15_i32 : i32 to vector<1x256xi32>
    %2 = arith.andi %0, %1 : vector<1x256xi32>
    %c4_i32 = arith.constant 4 : i32
    %3 = vector.broadcast %c4_i32 : i32 to vector<1x256xi32>
    %4 = arith.shrsi %0, %3 : vector<1x256xi32>
    %c15_i32_0 = arith.constant 15 : i32
    %5 = vector.broadcast %c15_i32_0 : i32 to vector<1x256xi32>
    %6 = arith.andi %4, %5 : vector<1x256xi32>
    %c-1_i32 = arith.constant -1 : i32
    %7 = vector.broadcast %c-1_i32 : i32 to vector<1x256xi32>
    %8 = arith.addi %2, %7 : vector<1x256xi32>
    %c0_i32 = arith.constant 0 : i32
    %9 = vector.broadcast %c0_i32 : i32 to vector<1x256xi32>
    %10 = arith.cmpi sge, %8, %9 : vector<1x256xi32>
    %c-1_i32_1 = arith.constant -1 : i32
    %11 = vector.broadcast %c-1_i32_1 : i32 to vector<1x256xi32>
    %12 = arith.addi %2, %11 : vector<1x256xi32>
    %c16_i32 = arith.constant 16 : i32
    %13 = vector.broadcast %c16_i32 : i32 to vector<1x256xi32>
    %14 = arith.cmpi slt, %12, %13 : vector<1x256xi32>
    %15 = arith.andi %10, %14 : vector<1x256xi1>
    %c-1_i32_2 = arith.constant -1 : i32
    %16 = vector.broadcast %c-1_i32_2 : i32 to vector<1x256xi32>
    %17 = arith.addi %6, %16 : vector<1x256xi32>
    %c0_i32_3 = arith.constant 0 : i32
    %18 = vector.broadcast %c0_i32_3 : i32 to vector<1x256xi32>
    %19 = arith.cmpi sge, %17, %18 : vector<1x256xi32>
    %20 = arith.andi %15, %19 : vector<1x256xi1>
    %c-1_i32_4 = arith.constant -1 : i32
    %21 = vector.broadcast %c-1_i32_4 : i32 to vector<1x256xi32>
    %22 = arith.addi %6, %21 : vector<1x256xi32>
    %c16_i32_5 = arith.constant 16 : i32
    %23 = vector.broadcast %c16_i32_5 : i32 to vector<1x256xi32>
    %24 = arith.cmpi slt, %22, %23 : vector<1x256xi32>
    %25 = arith.andi %20, %24 : vector<1x256xi1>
    %26 = arith.extui %25 : vector<1x256xi1> to vector<1x256xi32>
    %27 = arith.sitofp %26 : vector<1x256xi32> to vector<1x256xf32>
    %c0_i32_6 = arith.constant 0 : i32
    %28 = vector.broadcast %c0_i32_6 : i32 to vector<1x256xi32>
    %29 = arith.addi %2, %28 : vector<1x256xi32>
    %c0_i32_7 = arith.constant 0 : i32
    %30 = vector.broadcast %c0_i32_7 : i32 to vector<1x256xi32>
    %31 = arith.cmpi sge, %29, %30 : vector<1x256xi32>
    %c0_i32_8 = arith.constant 0 : i32
    %32 = vector.broadcast %c0_i32_8 : i32 to vector<1x256xi32>
    %33 = arith.addi %2, %32 : vector<1x256xi32>
    %c16_i32_9 = arith.constant 16 : i32
    %34 = vector.broadcast %c16_i32_9 : i32 to vector<1x256xi32>
    %35 = arith.cmpi slt, %33, %34 : vector<1x256xi32>
    %36 = arith.andi %31, %35 : vector<1x256xi1>
    %c-1_i32_10 = arith.constant -1 : i32
    %37 = vector.broadcast %c-1_i32_10 : i32 to vector<1x256xi32>
    %38 = arith.addi %6, %37 : vector<1x256xi32>
    %c0_i32_11 = arith.constant 0 : i32
    %39 = vector.broadcast %c0_i32_11 : i32 to vector<1x256xi32>
    %40 = arith.cmpi sge, %38, %39 : vector<1x256xi32>
    %41 = arith.andi %36, %40 : vector<1x256xi1>
    %c-1_i32_12 = arith.constant -1 : i32
    %42 = vector.broadcast %c-1_i32_12 : i32 to vector<1x256xi32>
    %43 = arith.addi %6, %42 : vector<1x256xi32>
    %c16_i32_13 = arith.constant 16 : i32
    %44 = vector.broadcast %c16_i32_13 : i32 to vector<1x256xi32>
    %45 = arith.cmpi slt, %43, %44 : vector<1x256xi32>
    %46 = arith.andi %41, %45 : vector<1x256xi1>
    %47 = arith.extui %46 : vector<1x256xi1> to vector<1x256xi32>
    %48 = arith.sitofp %47 : vector<1x256xi32> to vector<1x256xf32>
    %c1_i32 = arith.constant 1 : i32
    %49 = vector.broadcast %c1_i32 : i32 to vector<1x256xi32>
    %50 = arith.addi %2, %49 : vector<1x256xi32>
    %c0_i32_14 = arith.constant 0 : i32
    %51 = vector.broadcast %c0_i32_14 : i32 to vector<1x256xi32>
    %52 = arith.cmpi sge, %50, %51 : vector<1x256xi32>
    %c1_i32_15 = arith.constant 1 : i32
    %53 = vector.broadcast %c1_i32_15 : i32 to vector<1x256xi32>
    %54 = arith.addi %2, %53 : vector<1x256xi32>
    %c16_i32_16 = arith.constant 16 : i32
    %55 = vector.broadcast %c16_i32_16 : i32 to vector<1x256xi32>
    %56 = arith.cmpi slt, %54, %55 : vector<1x256xi32>
    %57 = arith.andi %52, %56 : vector<1x256xi1>
    %c-1_i32_17 = arith.constant -1 : i32
    %58 = vector.broadcast %c-1_i32_17 : i32 to vector<1x256xi32>
    %59 = arith.addi %6, %58 : vector<1x256xi32>
    %c0_i32_18 = arith.constant 0 : i32
    %60 = vector.broadcast %c0_i32_18 : i32 to vector<1x256xi32>
    %61 = arith.cmpi sge, %59, %60 : vector<1x256xi32>
    %62 = arith.andi %57, %61 : vector<1x256xi1>
    %c-1_i32_19 = arith.constant -1 : i32
    %63 = vector.broadcast %c-1_i32_19 : i32 to vector<1x256xi32>
    %64 = arith.addi %6, %63 : vector<1x256xi32>
    %c16_i32_20 = arith.constant 16 : i32
    %65 = vector.broadcast %c16_i32_20 : i32 to vector<1x256xi32>
    %66 = arith.cmpi slt, %64, %65 : vector<1x256xi32>
    %67 = arith.andi %62, %66 : vector<1x256xi1>
    %68 = arith.extui %67 : vector<1x256xi1> to vector<1x256xi32>
    %69 = arith.sitofp %68 : vector<1x256xi32> to vector<1x256xf32>
    %c-1_i32_21 = arith.constant -1 : i32
    %70 = vector.broadcast %c-1_i32_21 : i32 to vector<1x256xi32>
    %71 = arith.addi %2, %70 : vector<1x256xi32>
    %c0_i32_22 = arith.constant 0 : i32
    %72 = vector.broadcast %c0_i32_22 : i32 to vector<1x256xi32>
    %73 = arith.cmpi sge, %71, %72 : vector<1x256xi32>
    %c-1_i32_23 = arith.constant -1 : i32
    %74 = vector.broadcast %c-1_i32_23 : i32 to vector<1x256xi32>
    %75 = arith.addi %2, %74 : vector<1x256xi32>
    %c16_i32_24 = arith.constant 16 : i32
    %76 = vector.broadcast %c16_i32_24 : i32 to vector<1x256xi32>
    %77 = arith.cmpi slt, %75, %76 : vector<1x256xi32>
    %78 = arith.andi %73, %77 : vector<1x256xi1>
    %c0_i32_25 = arith.constant 0 : i32
    %79 = vector.broadcast %c0_i32_25 : i32 to vector<1x256xi32>
    %80 = arith.addi %6, %79 : vector<1x256xi32>
    %c0_i32_26 = arith.constant 0 : i32
    %81 = vector.broadcast %c0_i32_26 : i32 to vector<1x256xi32>
    %82 = arith.cmpi sge, %80, %81 : vector<1x256xi32>
    %83 = arith.andi %78, %82 : vector<1x256xi1>
    %c0_i32_27 = arith.constant 0 : i32
    %84 = vector.broadcast %c0_i32_27 : i32 to vector<1x256xi32>
    %85 = arith.addi %6, %84 : vector<1x256xi32>
    %c16_i32_28 = arith.constant 16 : i32
    %86 = vector.broadcast %c16_i32_28 : i32 to vector<1x256xi32>
    %87 = arith.cmpi slt, %85, %86 : vector<1x256xi32>
    %88 = arith.andi %83, %87 : vector<1x256xi1>
    %89 = arith.extui %88 : vector<1x256xi1> to vector<1x256xi32>
    %90 = arith.sitofp %89 : vector<1x256xi32> to vector<1x256xf32>
    %c1_i32_29 = arith.constant 1 : i32
    %91 = vector.broadcast %c1_i32_29 : i32 to vector<1x256xi32>
    %92 = arith.addi %2, %91 : vector<1x256xi32>
    %c0_i32_30 = arith.constant 0 : i32
    %93 = vector.broadcast %c0_i32_30 : i32 to vector<1x256xi32>
    %94 = arith.cmpi sge, %92, %93 : vector<1x256xi32>
    %c1_i32_31 = arith.constant 1 : i32
    %95 = vector.broadcast %c1_i32_31 : i32 to vector<1x256xi32>
    %96 = arith.addi %2, %95 : vector<1x256xi32>
    %c16_i32_32 = arith.constant 16 : i32
    %97 = vector.broadcast %c16_i32_32 : i32 to vector<1x256xi32>
    %98 = arith.cmpi slt, %96, %97 : vector<1x256xi32>
    %99 = arith.andi %94, %98 : vector<1x256xi1>
    %c0_i32_33 = arith.constant 0 : i32
    %100 = vector.broadcast %c0_i32_33 : i32 to vector<1x256xi32>
    %101 = arith.addi %6, %100 : vector<1x256xi32>
    %c0_i32_34 = arith.constant 0 : i32
    %102 = vector.broadcast %c0_i32_34 : i32 to vector<1x256xi32>
    %103 = arith.cmpi sge, %101, %102 : vector<1x256xi32>
    %104 = arith.andi %99, %103 : vector<1x256xi1>
    %c0_i32_35 = arith.constant 0 : i32
    %105 = vector.broadcast %c0_i32_35 : i32 to vector<1x256xi32>
    %106 = arith.addi %6, %105 : vector<1x256xi32>
    %c16_i32_36 = arith.constant 16 : i32
    %107 = vector.broadcast %c16_i32_36 : i32 to vector<1x256xi32>
    %108 = arith.cmpi slt, %106, %107 : vector<1x256xi32>
    %109 = arith.andi %104, %108 : vector<1x256xi1>
    %110 = arith.extui %109 : vector<1x256xi1> to vector<1x256xi32>
    %111 = arith.sitofp %110 : vector<1x256xi32> to vector<1x256xf32>
    %c-1_i32_37 = arith.constant -1 : i32
    %112 = vector.broadcast %c-1_i32_37 : i32 to vector<1x256xi32>
    %113 = arith.addi %2, %112 : vector<1x256xi32>
    %c0_i32_38 = arith.constant 0 : i32
    %114 = vector.broadcast %c0_i32_38 : i32 to vector<1x256xi32>
    %115 = arith.cmpi sge, %113, %114 : vector<1x256xi32>
    %c-1_i32_39 = arith.constant -1 : i32
    %116 = vector.broadcast %c-1_i32_39 : i32 to vector<1x256xi32>
    %117 = arith.addi %2, %116 : vector<1x256xi32>
    %c16_i32_40 = arith.constant 16 : i32
    %118 = vector.broadcast %c16_i32_40 : i32 to vector<1x256xi32>
    %119 = arith.cmpi slt, %117, %118 : vector<1x256xi32>
    %120 = arith.andi %115, %119 : vector<1x256xi1>
    %c1_i32_41 = arith.constant 1 : i32
    %121 = vector.broadcast %c1_i32_41 : i32 to vector<1x256xi32>
    %122 = arith.addi %6, %121 : vector<1x256xi32>
    %c0_i32_42 = arith.constant 0 : i32
    %123 = vector.broadcast %c0_i32_42 : i32 to vector<1x256xi32>
    %124 = arith.cmpi sge, %122, %123 : vector<1x256xi32>
    %125 = arith.andi %120, %124 : vector<1x256xi1>
    %c1_i32_43 = arith.constant 1 : i32
    %126 = vector.broadcast %c1_i32_43 : i32 to vector<1x256xi32>
    %127 = arith.addi %6, %126 : vector<1x256xi32>
    %c16_i32_44 = arith.constant 16 : i32
    %128 = vector.broadcast %c16_i32_44 : i32 to vector<1x256xi32>
    %129 = arith.cmpi slt, %127, %128 : vector<1x256xi32>
    %130 = arith.andi %125, %129 : vector<1x256xi1>
    %131 = arith.extui %130 : vector<1x256xi1> to vector<1x256xi32>
    %132 = arith.sitofp %131 : vector<1x256xi32> to vector<1x256xf32>
    %c0_i32_45 = arith.constant 0 : i32
    %133 = vector.broadcast %c0_i32_45 : i32 to vector<1x256xi32>
    %134 = arith.addi %2, %133 : vector<1x256xi32>
    %c0_i32_46 = arith.constant 0 : i32
    %135 = vector.broadcast %c0_i32_46 : i32 to vector<1x256xi32>
    %136 = arith.cmpi sge, %134, %135 : vector<1x256xi32>
    %c0_i32_47 = arith.constant 0 : i32
    %137 = vector.broadcast %c0_i32_47 : i32 to vector<1x256xi32>
    %138 = arith.addi %2, %137 : vector<1x256xi32>
    %c16_i32_48 = arith.constant 16 : i32
    %139 = vector.broadcast %c16_i32_48 : i32 to vector<1x256xi32>
    %140 = arith.cmpi slt, %138, %139 : vector<1x256xi32>
    %141 = arith.andi %136, %140 : vector<1x256xi1>
    %c1_i32_49 = arith.constant 1 : i32
    %142 = vector.broadcast %c1_i32_49 : i32 to vector<1x256xi32>
    %143 = arith.addi %6, %142 : vector<1x256xi32>
    %c0_i32_50 = arith.constant 0 : i32
    %144 = vector.broadcast %c0_i32_50 : i32 to vector<1x256xi32>
    %145 = arith.cmpi sge, %143, %144 : vector<1x256xi32>
    %146 = arith.andi %141, %145 : vector<1x256xi1>
    %c1_i32_51 = arith.constant 1 : i32
    %147 = vector.broadcast %c1_i32_51 : i32 to vector<1x256xi32>
    %148 = arith.addi %6, %147 : vector<1x256xi32>
    %c16_i32_52 = arith.constant 16 : i32
    %149 = vector.broadcast %c16_i32_52 : i32 to vector<1x256xi32>
    %150 = arith.cmpi slt, %148, %149 : vector<1x256xi32>
    %151 = arith.andi %146, %150 : vector<1x256xi1>
    %152 = arith.extui %151 : vector<1x256xi1> to vector<1x256xi32>
    %153 = arith.sitofp %152 : vector<1x256xi32> to vector<1x256xf32>
    %c1_i32_53 = arith.constant 1 : i32
    %154 = vector.broadcast %c1_i32_53 : i32 to vector<1x256xi32>
    %155 = arith.addi %2, %154 : vector<1x256xi32>
    %c0_i32_54 = arith.constant 0 : i32
    %156 = vector.broadcast %c0_i32_54 : i32 to vector<1x256xi32>
    %157 = arith.cmpi sge, %155, %156 : vector<1x256xi32>
    %c1_i32_55 = arith.constant 1 : i32
    %158 = vector.broadcast %c1_i32_55 : i32 to vector<1x256xi32>
    %159 = arith.addi %2, %158 : vector<1x256xi32>
    %c16_i32_56 = arith.constant 16 : i32
    %160 = vector.broadcast %c16_i32_56 : i32 to vector<1x256xi32>
    %161 = arith.cmpi slt, %159, %160 : vector<1x256xi32>
    %162 = arith.andi %157, %161 : vector<1x256xi1>
    %c1_i32_57 = arith.constant 1 : i32
    %163 = vector.broadcast %c1_i32_57 : i32 to vector<1x256xi32>
    %164 = arith.addi %6, %163 : vector<1x256xi32>
    %c0_i32_58 = arith.constant 0 : i32
    %165 = vector.broadcast %c0_i32_58 : i32 to vector<1x256xi32>
    %166 = arith.cmpi sge, %164, %165 : vector<1x256xi32>
    %167 = arith.andi %162, %166 : vector<1x256xi1>
    %c1_i32_59 = arith.constant 1 : i32
    %168 = vector.broadcast %c1_i32_59 : i32 to vector<1x256xi32>
    %169 = arith.addi %6, %168 : vector<1x256xi32>
    %c16_i32_60 = arith.constant 16 : i32
    %170 = vector.broadcast %c16_i32_60 : i32 to vector<1x256xi32>
    %171 = arith.cmpi slt, %169, %170 : vector<1x256xi32>
    %172 = arith.andi %167, %171 : vector<1x256xi1>
    %173 = arith.extui %172 : vector<1x256xi1> to vector<1x256xi32>
    %174 = arith.sitofp %173 : vector<1x256xi32> to vector<1x256xf32>
    %175 = tpu.iota {dimensions = array<i32: 0>} : vector<8x1xi32>
    %c3_i32 = arith.constant 3 : i32
    %176 = vector.broadcast %c3_i32 : i32 to vector<8x1xi32>
    %177 = arith.andi %175, %176 : vector<8x1xi32>
    %c1_i32_61 = arith.constant 1 : i32
    %178 = vector.broadcast %c1_i32_61 : i32 to vector<8x1xi32>
    %179 = arith.andi %175, %178 : vector<8x1xi32>
    %c0_i32_62 = arith.constant 0 : i32
    %180 = vector.broadcast %c0_i32_62 : i32 to vector<8x1xi32>
    %181 = arith.cmpi eq, %179, %180 : vector<8x1xi32>
    %c0 = arith.constant 0 : index
    %c0_63 = arith.constant 0 : index
    %182 = vector.load %arg0[%c0, %c0_63] : memref<8x256xf32, #tpu.memory_space<vmem>>, vector<8x256xf32>
    %c0_64 = arith.constant 0 : index
    %c0_65 = arith.constant 0 : index
    %183 = vector.load %arg2[%c0_64, %c0_65] : memref<8x5xf32, #tpu.memory_space<vmem>>, vector<8x5xf32>
    %c0_66 = arith.constant 0 : index
    %c0_67 = arith.constant 0 : index
    %184 = vector.load %arg1[%c0_66, %c0_67] : memref<8x36xf32, #tpu.memory_space<vmem>>, vector<8x36xf32>
    %cst = arith.constant 0.000000e+00 : f32
    %185 = vector.broadcast %cst : f32 to vector<8x36xf32>
    %186 = arith.maximumf %184, %185 : vector<8x36xf32>
    %187 = vector.extract_strided_slice %183 {offsets = [0, 0], sizes = [8, 1], strides = [1, 1]} : vector<8x5xf32> to vector<8x1xf32>
    %188 = vector.broadcast %187 : vector<8x1xf32> to vector<8x256xf32>
    %189 = arith.mulf %182, %188 : vector<8x256xf32>
    %190 = vector.extract_strided_slice %183 {offsets = [0, 4], sizes = [8, 1], strides = [1, 1]} : vector<8x5xf32> to vector<8x1xf32>
    %191 = vector.broadcast %190 : vector<8x1xf32> to vector<8x256xf32>
    %192 = arith.addf %189, %191 : vector<8x256xf32>
    %c1_i32_68 = arith.constant 1 : i32
    %193 = vector.broadcast %c1_i32_68 : i32 to vector<8x1xi32>
    %194 = arith.cmpi sge, %177, %193 : vector<8x1xi32>
    %c1_i32_69 = arith.constant 1 : i32
    %195 = tpu.dynamic_rotate %182 by %c1_i32_69 dim 0 : vector<8x256xf32>, i32 -> vector<8x256xf32>
    %c5_i32 = arith.constant 5 : i32
    %196 = tpu.dynamic_rotate %182 by %c5_i32 dim 0 : vector<8x256xf32>, i32 -> vector<8x256xf32>
    %197 = vector.shape_cast %194 : vector<8x1xi1> to vector<8x1xi1>
    %198 = vector.broadcast %197 : vector<8x1xi1> to vector<8x256xi1>
    %199 = arith.select %198, %195, %196 : vector<8x256xi1>, vector<8x256xf32>
    %200 = vector.extract_strided_slice %183 {offsets = [0, 1], sizes = [8, 1], strides = [1, 1]} : vector<8x5xf32> to vector<8x1xf32>
    %201 = vector.broadcast %200 : vector<8x1xf32> to vector<8x256xf32>
    %202 = arith.mulf %199, %201 : vector<8x256xf32>
    %203 = arith.addf %192, %202 : vector<8x256xf32>
    %c2_i32 = arith.constant 2 : i32
    %204 = vector.broadcast %c2_i32 : i32 to vector<8x1xi32>
    %205 = arith.cmpi sge, %177, %204 : vector<8x1xi32>
    %c2_i32_70 = arith.constant 2 : i32
    %206 = tpu.dynamic_rotate %182 by %c2_i32_70 dim 0 : vector<8x256xf32>, i32 -> vector<8x256xf32>
    %c6_i32 = arith.constant 6 : i32
    %207 = tpu.dynamic_rotate %182 by %c6_i32 dim 0 : vector<8x256xf32>, i32 -> vector<8x256xf32>
    %208 = vector.shape_cast %205 : vector<8x1xi1> to vector<8x1xi1>
    %209 = vector.broadcast %208 : vector<8x1xi1> to vector<8x256xi1>
    %210 = arith.select %209, %206, %207 : vector<8x256xi1>, vector<8x256xf32>
    %211 = vector.extract_strided_slice %183 {offsets = [0, 2], sizes = [8, 1], strides = [1, 1]} : vector<8x5xf32> to vector<8x1xf32>
    %212 = vector.broadcast %211 : vector<8x1xf32> to vector<8x256xf32>
    %213 = arith.mulf %210, %212 : vector<8x256xf32>
    %214 = arith.addf %203, %213 : vector<8x256xf32>
    %c3_i32_71 = arith.constant 3 : i32
    %215 = vector.broadcast %c3_i32_71 : i32 to vector<8x1xi32>
    %216 = arith.cmpi sge, %177, %215 : vector<8x1xi32>
    %c3_i32_72 = arith.constant 3 : i32
    %217 = tpu.dynamic_rotate %182 by %c3_i32_72 dim 0 : vector<8x256xf32>, i32 -> vector<8x256xf32>
    %c7_i32 = arith.constant 7 : i32
    %218 = tpu.dynamic_rotate %182 by %c7_i32 dim 0 : vector<8x256xf32>, i32 -> vector<8x256xf32>
    %219 = vector.shape_cast %216 : vector<8x1xi1> to vector<8x1xi1>
    %220 = vector.broadcast %219 : vector<8x1xi1> to vector<8x256xi1>
    %221 = arith.select %220, %217, %218 : vector<8x256xi1>, vector<8x256xf32>
    %222 = vector.extract_strided_slice %183 {offsets = [0, 3], sizes = [8, 1], strides = [1, 1]} : vector<8x5xf32> to vector<8x1xf32>
    %223 = vector.broadcast %222 : vector<8x1xf32> to vector<8x256xf32>
    %224 = arith.mulf %221, %223 : vector<8x256xf32>
    %225 = arith.addf %214, %224 : vector<8x256xf32>
    %cst_73 = arith.constant 0.000000e+00 : f32
    %226 = vector.broadcast %cst_73 : f32 to vector<8x256xf32>
    %227 = arith.maximumf %225, %226 : vector<8x256xf32>
    %c7_i32_74 = arith.constant 7 : i32
    %228 = tpu.dynamic_rotate %182 by %c7_i32_74 dim 0 : vector<8x256xf32>, i32 -> vector<8x256xf32>
    %c1_i32_75 = arith.constant 1 : i32
    %229 = tpu.dynamic_rotate %182 by %c1_i32_75 dim 0 : vector<8x256xf32>, i32 -> vector<8x256xf32>
    %230 = vector.shape_cast %181 : vector<8x1xi1> to vector<8x1xi1>
    %231 = vector.broadcast %230 : vector<8x1xi1> to vector<8x256xi1>
    %232 = arith.select %231, %228, %229 : vector<8x256xi1>, vector<8x256xf32>
    %c7_i32_76 = arith.constant 7 : i32
    %233 = tpu.dynamic_rotate %227 by %c7_i32_76 dim 0 : vector<8x256xf32>, i32 -> vector<8x256xf32>
    %c1_i32_77 = arith.constant 1 : i32
    %234 = tpu.dynamic_rotate %227 by %c1_i32_77 dim 0 : vector<8x256xf32>, i32 -> vector<8x256xf32>
    %235 = vector.shape_cast %181 : vector<8x1xi1> to vector<8x1xi1>
    %236 = vector.broadcast %235 : vector<8x1xi1> to vector<8x256xi1>
    %237 = arith.select %236, %233, %234 : vector<8x256xi1>, vector<8x256xf32>
    %c17_i32 = arith.constant 17 : i32
    %238 = tpu.dynamic_rotate %227 by %c17_i32 dim 1 : vector<8x256xf32>, i32 -> vector<8x256xf32>
    %239 = vector.extract_strided_slice %186 {offsets = [0, 0], sizes = [8, 1], strides = [1, 1]} : vector<8x36xf32> to vector<8x1xf32>
    %240 = vector.broadcast %239 : vector<8x1xf32> to vector<8x256xf32>
    %241 = arith.mulf %238, %240 : vector<8x256xf32>
    %c17_i32_78 = arith.constant 17 : i32
    %242 = tpu.dynamic_rotate %237 by %c17_i32_78 dim 1 : vector<8x256xf32>, i32 -> vector<8x256xf32>
    %243 = vector.extract_strided_slice %186 {offsets = [0, 9], sizes = [8, 1], strides = [1, 1]} : vector<8x36xf32> to vector<8x1xf32>
    %244 = vector.broadcast %243 : vector<8x1xf32> to vector<8x256xf32>
    %245 = arith.mulf %242, %244 : vector<8x256xf32>
    %246 = arith.addf %241, %245 : vector<8x256xf32>
    %247 = vector.broadcast %27 : vector<1x256xf32> to vector<8x256xf32>
    %248 = arith.mulf %246, %247 : vector<8x256xf32>
    %c16_i32_79 = arith.constant 16 : i32
    %249 = tpu.dynamic_rotate %227 by %c16_i32_79 dim 1 : vector<8x256xf32>, i32 -> vector<8x256xf32>
    %250 = vector.extract_strided_slice %186 {offsets = [0, 1], sizes = [8, 1], strides = [1, 1]} : vector<8x36xf32> to vector<8x1xf32>
    %251 = vector.broadcast %250 : vector<8x1xf32> to vector<8x256xf32>
    %252 = arith.mulf %249, %251 : vector<8x256xf32>
    %c16_i32_80 = arith.constant 16 : i32
    %253 = tpu.dynamic_rotate %237 by %c16_i32_80 dim 1 : vector<8x256xf32>, i32 -> vector<8x256xf32>
    %254 = vector.extract_strided_slice %186 {offsets = [0, 10], sizes = [8, 1], strides = [1, 1]} : vector<8x36xf32> to vector<8x1xf32>
    %255 = vector.broadcast %254 : vector<8x1xf32> to vector<8x256xf32>
    %256 = arith.mulf %253, %255 : vector<8x256xf32>
    %257 = arith.addf %252, %256 : vector<8x256xf32>
    %258 = vector.broadcast %48 : vector<1x256xf32> to vector<8x256xf32>
    %259 = arith.mulf %257, %258 : vector<8x256xf32>
    %260 = arith.addf %248, %259 : vector<8x256xf32>
    %c15_i32_81 = arith.constant 15 : i32
    %261 = tpu.dynamic_rotate %227 by %c15_i32_81 dim 1 : vector<8x256xf32>, i32 -> vector<8x256xf32>
    %262 = vector.extract_strided_slice %186 {offsets = [0, 2], sizes = [8, 1], strides = [1, 1]} : vector<8x36xf32> to vector<8x1xf32>
    %263 = vector.broadcast %262 : vector<8x1xf32> to vector<8x256xf32>
    %264 = arith.mulf %261, %263 : vector<8x256xf32>
    %c15_i32_82 = arith.constant 15 : i32
    %265 = tpu.dynamic_rotate %237 by %c15_i32_82 dim 1 : vector<8x256xf32>, i32 -> vector<8x256xf32>
    %266 = vector.extract_strided_slice %186 {offsets = [0, 11], sizes = [8, 1], strides = [1, 1]} : vector<8x36xf32> to vector<8x1xf32>
    %267 = vector.broadcast %266 : vector<8x1xf32> to vector<8x256xf32>
    %268 = arith.mulf %265, %267 : vector<8x256xf32>
    %269 = arith.addf %264, %268 : vector<8x256xf32>
    %270 = vector.broadcast %69 : vector<1x256xf32> to vector<8x256xf32>
    %271 = arith.mulf %269, %270 : vector<8x256xf32>
    %272 = arith.addf %260, %271 : vector<8x256xf32>
    %c1_i32_83 = arith.constant 1 : i32
    %273 = tpu.dynamic_rotate %227 by %c1_i32_83 dim 1 : vector<8x256xf32>, i32 -> vector<8x256xf32>
    %274 = vector.extract_strided_slice %186 {offsets = [0, 3], sizes = [8, 1], strides = [1, 1]} : vector<8x36xf32> to vector<8x1xf32>
    %275 = vector.broadcast %274 : vector<8x1xf32> to vector<8x256xf32>
    %276 = arith.mulf %273, %275 : vector<8x256xf32>
    %c1_i32_84 = arith.constant 1 : i32
    %277 = tpu.dynamic_rotate %237 by %c1_i32_84 dim 1 : vector<8x256xf32>, i32 -> vector<8x256xf32>
    %278 = vector.extract_strided_slice %186 {offsets = [0, 12], sizes = [8, 1], strides = [1, 1]} : vector<8x36xf32> to vector<8x1xf32>
    %279 = vector.broadcast %278 : vector<8x1xf32> to vector<8x256xf32>
    %280 = arith.mulf %277, %279 : vector<8x256xf32>
    %281 = arith.addf %276, %280 : vector<8x256xf32>
    %282 = vector.broadcast %90 : vector<1x256xf32> to vector<8x256xf32>
    %283 = arith.mulf %281, %282 : vector<8x256xf32>
    %284 = arith.addf %272, %283 : vector<8x256xf32>
    %285 = vector.extract_strided_slice %186 {offsets = [0, 4], sizes = [8, 1], strides = [1, 1]} : vector<8x36xf32> to vector<8x1xf32>
    %286 = vector.broadcast %285 : vector<8x1xf32> to vector<8x256xf32>
    %287 = arith.mulf %227, %286 : vector<8x256xf32>
    %288 = vector.extract_strided_slice %186 {offsets = [0, 13], sizes = [8, 1], strides = [1, 1]} : vector<8x36xf32> to vector<8x1xf32>
    %289 = vector.broadcast %288 : vector<8x1xf32> to vector<8x256xf32>
    %290 = arith.mulf %237, %289 : vector<8x256xf32>
    %291 = arith.addf %287, %290 : vector<8x256xf32>
    %292 = arith.addf %284, %291 : vector<8x256xf32>
    %c255_i32 = arith.constant 255 : i32
    %293 = tpu.dynamic_rotate %227 by %c255_i32 dim 1 : vector<8x256xf32>, i32 -> vector<8x256xf32>
    %294 = vector.extract_strided_slice %186 {offsets = [0, 5], sizes = [8, 1], strides = [1, 1]} : vector<8x36xf32> to vector<8x1xf32>
    %295 = vector.broadcast %294 : vector<8x1xf32> to vector<8x256xf32>
    %296 = arith.mulf %293, %295 : vector<8x256xf32>
    %c255_i32_85 = arith.constant 255 : i32
    %297 = tpu.dynamic_rotate %237 by %c255_i32_85 dim 1 : vector<8x256xf32>, i32 -> vector<8x256xf32>
    %298 = vector.extract_strided_slice %186 {offsets = [0, 14], sizes = [8, 1], strides = [1, 1]} : vector<8x36xf32> to vector<8x1xf32>
    %299 = vector.broadcast %298 : vector<8x1xf32> to vector<8x256xf32>
    %300 = arith.mulf %297, %299 : vector<8x256xf32>
    %301 = arith.addf %296, %300 : vector<8x256xf32>
    %302 = vector.broadcast %111 : vector<1x256xf32> to vector<8x256xf32>
    %303 = arith.mulf %301, %302 : vector<8x256xf32>
    %304 = arith.addf %292, %303 : vector<8x256xf32>
    %c241_i32 = arith.constant 241 : i32
    %305 = tpu.dynamic_rotate %227 by %c241_i32 dim 1 : vector<8x256xf32>, i32 -> vector<8x256xf32>
    %306 = vector.extract_strided_slice %186 {offsets = [0, 6], sizes = [8, 1], strides = [1, 1]} : vector<8x36xf32> to vector<8x1xf32>
    %307 = vector.broadcast %306 : vector<8x1xf32> to vector<8x256xf32>
    %308 = arith.mulf %305, %307 : vector<8x256xf32>
    %c241_i32_86 = arith.constant 241 : i32
    %309 = tpu.dynamic_rotate %237 by %c241_i32_86 dim 1 : vector<8x256xf32>, i32 -> vector<8x256xf32>
    %310 = vector.extract_strided_slice %186 {offsets = [0, 15], sizes = [8, 1], strides = [1, 1]} : vector<8x36xf32> to vector<8x1xf32>
    %311 = vector.broadcast %310 : vector<8x1xf32> to vector<8x256xf32>
    %312 = arith.mulf %309, %311 : vector<8x256xf32>
    %313 = arith.addf %308, %312 : vector<8x256xf32>
    %314 = vector.broadcast %132 : vector<1x256xf32> to vector<8x256xf32>
    %315 = arith.mulf %313, %314 : vector<8x256xf32>
    %316 = arith.addf %304, %315 : vector<8x256xf32>
    %c240_i32 = arith.constant 240 : i32
    %317 = tpu.dynamic_rotate %227 by %c240_i32 dim 1 : vector<8x256xf32>, i32 -> vector<8x256xf32>
    %318 = vector.extract_strided_slice %186 {offsets = [0, 7], sizes = [8, 1], strides = [1, 1]} : vector<8x36xf32> to vector<8x1xf32>
    %319 = vector.broadcast %318 : vector<8x1xf32> to vector<8x256xf32>
    %320 = arith.mulf %317, %319 : vector<8x256xf32>
    %c240_i32_87 = arith.constant 240 : i32
    %321 = tpu.dynamic_rotate %237 by %c240_i32_87 dim 1 : vector<8x256xf32>, i32 -> vector<8x256xf32>
    %322 = vector.extract_strided_slice %186 {offsets = [0, 16], sizes = [8, 1], strides = [1, 1]} : vector<8x36xf32> to vector<8x1xf32>
    %323 = vector.broadcast %322 : vector<8x1xf32> to vector<8x256xf32>
    %324 = arith.mulf %321, %323 : vector<8x256xf32>
    %325 = arith.addf %320, %324 : vector<8x256xf32>
    %326 = vector.broadcast %153 : vector<1x256xf32> to vector<8x256xf32>
    %327 = arith.mulf %325, %326 : vector<8x256xf32>
    %328 = arith.addf %316, %327 : vector<8x256xf32>
    %c239_i32 = arith.constant 239 : i32
    %329 = tpu.dynamic_rotate %227 by %c239_i32 dim 1 : vector<8x256xf32>, i32 -> vector<8x256xf32>
    %330 = vector.extract_strided_slice %186 {offsets = [0, 8], sizes = [8, 1], strides = [1, 1]} : vector<8x36xf32> to vector<8x1xf32>
    %331 = vector.broadcast %330 : vector<8x1xf32> to vector<8x256xf32>
    %332 = arith.mulf %329, %331 : vector<8x256xf32>
    %c239_i32_88 = arith.constant 239 : i32
    %333 = tpu.dynamic_rotate %237 by %c239_i32_88 dim 1 : vector<8x256xf32>, i32 -> vector<8x256xf32>
    %334 = vector.extract_strided_slice %186 {offsets = [0, 17], sizes = [8, 1], strides = [1, 1]} : vector<8x36xf32> to vector<8x1xf32>
    %335 = vector.broadcast %334 : vector<8x1xf32> to vector<8x256xf32>
    %336 = arith.mulf %333, %335 : vector<8x256xf32>
    %337 = arith.addf %332, %336 : vector<8x256xf32>
    %338 = vector.broadcast %174 : vector<1x256xf32> to vector<8x256xf32>
    %339 = arith.mulf %337, %338 : vector<8x256xf32>
    %340 = arith.addf %328, %339 : vector<8x256xf32>
    %c7_i32_89 = arith.constant 7 : i32
    %341 = tpu.dynamic_rotate %340 by %c7_i32_89 dim 0 : vector<8x256xf32>, i32 -> vector<8x256xf32>
    %c1_i32_90 = arith.constant 1 : i32
    %342 = tpu.dynamic_rotate %340 by %c1_i32_90 dim 0 : vector<8x256xf32>, i32 -> vector<8x256xf32>
    %343 = vector.shape_cast %181 : vector<8x1xi1> to vector<8x1xi1>
    %344 = vector.broadcast %343 : vector<8x1xi1> to vector<8x256xi1>
    %345 = arith.select %344, %341, %342 : vector<8x256xi1>, vector<8x256xf32>
    %346 = vector.extract_strided_slice %186 {offsets = [0, 18], sizes = [8, 1], strides = [1, 1]} : vector<8x36xf32> to vector<8x1xf32>
    %347 = vector.extract_strided_slice %186 {offsets = [0, 27], sizes = [8, 1], strides = [1, 1]} : vector<8x36xf32> to vector<8x1xf32>
    %c17_i32_91 = arith.constant 17 : i32
    %348 = tpu.dynamic_rotate %182 by %c17_i32_91 dim 1 : vector<8x256xf32>, i32 -> vector<8x256xf32>
    %349 = vector.broadcast %346 : vector<8x1xf32> to vector<8x256xf32>
    %350 = arith.mulf %348, %349 : vector<8x256xf32>
    %c17_i32_92 = arith.constant 17 : i32
    %351 = tpu.dynamic_rotate %232 by %c17_i32_92 dim 1 : vector<8x256xf32>, i32 -> vector<8x256xf32>
    %352 = vector.broadcast %347 : vector<8x1xf32> to vector<8x256xf32>
    %353 = arith.mulf %351, %352 : vector<8x256xf32>
    %354 = arith.addf %350, %353 : vector<8x256xf32>
    %c17_i32_93 = arith.constant 17 : i32
    %355 = tpu.dynamic_rotate %340 by %c17_i32_93 dim 1 : vector<8x256xf32>, i32 -> vector<8x256xf32>
    %356 = vector.broadcast %346 : vector<8x1xf32> to vector<8x256xf32>
    %357 = arith.mulf %355, %356 : vector<8x256xf32>
    %c17_i32_94 = arith.constant 17 : i32
    %358 = tpu.dynamic_rotate %345 by %c17_i32_94 dim 1 : vector<8x256xf32>, i32 -> vector<8x256xf32>
    %359 = vector.broadcast %347 : vector<8x1xf32> to vector<8x256xf32>
    %360 = arith.mulf %358, %359 : vector<8x256xf32>
    %361 = arith.addf %357, %360 : vector<8x256xf32>
    %362 = vector.broadcast %27 : vector<1x256xf32> to vector<8x256xf32>
    %363 = arith.mulf %354, %362 : vector<8x256xf32>
    %364 = vector.broadcast %27 : vector<1x256xf32> to vector<8x256xf32>
    %365 = arith.mulf %361, %364 : vector<8x256xf32>
    %366 = vector.extract_strided_slice %186 {offsets = [0, 19], sizes = [8, 1], strides = [1, 1]} : vector<8x36xf32> to vector<8x1xf32>
    %367 = vector.extract_strided_slice %186 {offsets = [0, 28], sizes = [8, 1], strides = [1, 1]} : vector<8x36xf32> to vector<8x1xf32>
    %c16_i32_95 = arith.constant 16 : i32
    %368 = tpu.dynamic_rotate %182 by %c16_i32_95 dim 1 : vector<8x256xf32>, i32 -> vector<8x256xf32>
    %369 = vector.broadcast %366 : vector<8x1xf32> to vector<8x256xf32>
    %370 = arith.mulf %368, %369 : vector<8x256xf32>
    %c16_i32_96 = arith.constant 16 : i32
    %371 = tpu.dynamic_rotate %232 by %c16_i32_96 dim 1 : vector<8x256xf32>, i32 -> vector<8x256xf32>
    %372 = vector.broadcast %367 : vector<8x1xf32> to vector<8x256xf32>
    %373 = arith.mulf %371, %372 : vector<8x256xf32>
    %374 = arith.addf %370, %373 : vector<8x256xf32>
    %c16_i32_97 = arith.constant 16 : i32
    %375 = tpu.dynamic_rotate %340 by %c16_i32_97 dim 1 : vector<8x256xf32>, i32 -> vector<8x256xf32>
    %376 = vector.broadcast %366 : vector<8x1xf32> to vector<8x256xf32>
    %377 = arith.mulf %375, %376 : vector<8x256xf32>
    %c16_i32_98 = arith.constant 16 : i32
    %378 = tpu.dynamic_rotate %345 by %c16_i32_98 dim 1 : vector<8x256xf32>, i32 -> vector<8x256xf32>
    %379 = vector.broadcast %367 : vector<8x1xf32> to vector<8x256xf32>
    %380 = arith.mulf %378, %379 : vector<8x256xf32>
    %381 = arith.addf %377, %380 : vector<8x256xf32>
    %382 = vector.broadcast %48 : vector<1x256xf32> to vector<8x256xf32>
    %383 = arith.mulf %374, %382 : vector<8x256xf32>
    %384 = vector.broadcast %48 : vector<1x256xf32> to vector<8x256xf32>
    %385 = arith.mulf %381, %384 : vector<8x256xf32>
    %386 = arith.addf %363, %383 : vector<8x256xf32>
    %387 = arith.addf %365, %385 : vector<8x256xf32>
    %388 = vector.extract_strided_slice %186 {offsets = [0, 20], sizes = [8, 1], strides = [1, 1]} : vector<8x36xf32> to vector<8x1xf32>
    %389 = vector.extract_strided_slice %186 {offsets = [0, 29], sizes = [8, 1], strides = [1, 1]} : vector<8x36xf32> to vector<8x1xf32>
    %c15_i32_99 = arith.constant 15 : i32
    %390 = tpu.dynamic_rotate %182 by %c15_i32_99 dim 1 : vector<8x256xf32>, i32 -> vector<8x256xf32>
    %391 = vector.broadcast %388 : vector<8x1xf32> to vector<8x256xf32>
    %392 = arith.mulf %390, %391 : vector<8x256xf32>
    %c15_i32_100 = arith.constant 15 : i32
    %393 = tpu.dynamic_rotate %232 by %c15_i32_100 dim 1 : vector<8x256xf32>, i32 -> vector<8x256xf32>
    %394 = vector.broadcast %389 : vector<8x1xf32> to vector<8x256xf32>
    %395 = arith.mulf %393, %394 : vector<8x256xf32>
    %396 = arith.addf %392, %395 : vector<8x256xf32>
    %c15_i32_101 = arith.constant 15 : i32
    %397 = tpu.dynamic_rotate %340 by %c15_i32_101 dim 1 : vector<8x256xf32>, i32 -> vector<8x256xf32>
    %398 = vector.broadcast %388 : vector<8x1xf32> to vector<8x256xf32>
    %399 = arith.mulf %397, %398 : vector<8x256xf32>
    %c15_i32_102 = arith.constant 15 : i32
    %400 = tpu.dynamic_rotate %345 by %c15_i32_102 dim 1 : vector<8x256xf32>, i32 -> vector<8x256xf32>
    %401 = vector.broadcast %389 : vector<8x1xf32> to vector<8x256xf32>
    %402 = arith.mulf %400, %401 : vector<8x256xf32>
    %403 = arith.addf %399, %402 : vector<8x256xf32>
    %404 = vector.broadcast %69 : vector<1x256xf32> to vector<8x256xf32>
    %405 = arith.mulf %396, %404 : vector<8x256xf32>
    %406 = vector.broadcast %69 : vector<1x256xf32> to vector<8x256xf32>
    %407 = arith.mulf %403, %406 : vector<8x256xf32>
    %408 = arith.addf %386, %405 : vector<8x256xf32>
    %409 = arith.addf %387, %407 : vector<8x256xf32>
    %410 = vector.extract_strided_slice %186 {offsets = [0, 21], sizes = [8, 1], strides = [1, 1]} : vector<8x36xf32> to vector<8x1xf32>
    %411 = vector.extract_strided_slice %186 {offsets = [0, 30], sizes = [8, 1], strides = [1, 1]} : vector<8x36xf32> to vector<8x1xf32>
    %c1_i32_103 = arith.constant 1 : i32
    %412 = tpu.dynamic_rotate %182 by %c1_i32_103 dim 1 : vector<8x256xf32>, i32 -> vector<8x256xf32>
    %413 = vector.broadcast %410 : vector<8x1xf32> to vector<8x256xf32>
    %414 = arith.mulf %412, %413 : vector<8x256xf32>
    %c1_i32_104 = arith.constant 1 : i32
    %415 = tpu.dynamic_rotate %232 by %c1_i32_104 dim 1 : vector<8x256xf32>, i32 -> vector<8x256xf32>
    %416 = vector.broadcast %411 : vector<8x1xf32> to vector<8x256xf32>
    %417 = arith.mulf %415, %416 : vector<8x256xf32>
    %418 = arith.addf %414, %417 : vector<8x256xf32>
    %c1_i32_105 = arith.constant 1 : i32
    %419 = tpu.dynamic_rotate %340 by %c1_i32_105 dim 1 : vector<8x256xf32>, i32 -> vector<8x256xf32>
    %420 = vector.broadcast %410 : vector<8x1xf32> to vector<8x256xf32>
    %421 = arith.mulf %419, %420 : vector<8x256xf32>
    %c1_i32_106 = arith.constant 1 : i32
    %422 = tpu.dynamic_rotate %345 by %c1_i32_106 dim 1 : vector<8x256xf32>, i32 -> vector<8x256xf32>
    %423 = vector.broadcast %411 : vector<8x1xf32> to vector<8x256xf32>
    %424 = arith.mulf %422, %423 : vector<8x256xf32>
    %425 = arith.addf %421, %424 : vector<8x256xf32>
    %426 = vector.broadcast %90 : vector<1x256xf32> to vector<8x256xf32>
    %427 = arith.mulf %418, %426 : vector<8x256xf32>
    %428 = vector.broadcast %90 : vector<1x256xf32> to vector<8x256xf32>
    %429 = arith.mulf %425, %428 : vector<8x256xf32>
    %430 = arith.addf %408, %427 : vector<8x256xf32>
    %431 = arith.addf %409, %429 : vector<8x256xf32>
    %432 = vector.extract_strided_slice %186 {offsets = [0, 22], sizes = [8, 1], strides = [1, 1]} : vector<8x36xf32> to vector<8x1xf32>
    %433 = vector.extract_strided_slice %186 {offsets = [0, 31], sizes = [8, 1], strides = [1, 1]} : vector<8x36xf32> to vector<8x1xf32>
    %434 = vector.broadcast %432 : vector<8x1xf32> to vector<8x256xf32>
    %435 = arith.mulf %182, %434 : vector<8x256xf32>
    %436 = vector.broadcast %433 : vector<8x1xf32> to vector<8x256xf32>
    %437 = arith.mulf %232, %436 : vector<8x256xf32>
    %438 = arith.addf %435, %437 : vector<8x256xf32>
    %439 = vector.broadcast %432 : vector<8x1xf32> to vector<8x256xf32>
    %440 = arith.mulf %340, %439 : vector<8x256xf32>
    %441 = vector.broadcast %433 : vector<8x1xf32> to vector<8x256xf32>
    %442 = arith.mulf %345, %441 : vector<8x256xf32>
    %443 = arith.addf %440, %442 : vector<8x256xf32>
    %444 = arith.addf %430, %438 : vector<8x256xf32>
    %445 = arith.addf %431, %443 : vector<8x256xf32>
    %446 = vector.extract_strided_slice %186 {offsets = [0, 23], sizes = [8, 1], strides = [1, 1]} : vector<8x36xf32> to vector<8x1xf32>
    %447 = vector.extract_strided_slice %186 {offsets = [0, 32], sizes = [8, 1], strides = [1, 1]} : vector<8x36xf32> to vector<8x1xf32>
    %c255_i32_107 = arith.constant 255 : i32
    %448 = tpu.dynamic_rotate %182 by %c255_i32_107 dim 1 : vector<8x256xf32>, i32 -> vector<8x256xf32>
    %449 = vector.broadcast %446 : vector<8x1xf32> to vector<8x256xf32>
    %450 = arith.mulf %448, %449 : vector<8x256xf32>
    %c255_i32_108 = arith.constant 255 : i32
    %451 = tpu.dynamic_rotate %232 by %c255_i32_108 dim 1 : vector<8x256xf32>, i32 -> vector<8x256xf32>
    %452 = vector.broadcast %447 : vector<8x1xf32> to vector<8x256xf32>
    %453 = arith.mulf %451, %452 : vector<8x256xf32>
    %454 = arith.addf %450, %453 : vector<8x256xf32>
    %c255_i32_109 = arith.constant 255 : i32
    %455 = tpu.dynamic_rotate %340 by %c255_i32_109 dim 1 : vector<8x256xf32>, i32 -> vector<8x256xf32>
    %456 = vector.broadcast %446 : vector<8x1xf32> to vector<8x256xf32>
    %457 = arith.mulf %455, %456 : vector<8x256xf32>
    %c255_i32_110 = arith.constant 255 : i32
    %458 = tpu.dynamic_rotate %345 by %c255_i32_110 dim 1 : vector<8x256xf32>, i32 -> vector<8x256xf32>
    %459 = vector.broadcast %447 : vector<8x1xf32> to vector<8x256xf32>
    %460 = arith.mulf %458, %459 : vector<8x256xf32>
    %461 = arith.addf %457, %460 : vector<8x256xf32>
    %462 = vector.broadcast %111 : vector<1x256xf32> to vector<8x256xf32>
    %463 = arith.mulf %454, %462 : vector<8x256xf32>
    %464 = vector.broadcast %111 : vector<1x256xf32> to vector<8x256xf32>
    %465 = arith.mulf %461, %464 : vector<8x256xf32>
    %466 = arith.addf %444, %463 : vector<8x256xf32>
    %467 = arith.addf %445, %465 : vector<8x256xf32>
    %468 = vector.extract_strided_slice %186 {offsets = [0, 24], sizes = [8, 1], strides = [1, 1]} : vector<8x36xf32> to vector<8x1xf32>
    %469 = vector.extract_strided_slice %186 {offsets = [0, 33], sizes = [8, 1], strides = [1, 1]} : vector<8x36xf32> to vector<8x1xf32>
    %c241_i32_111 = arith.constant 241 : i32
    %470 = tpu.dynamic_rotate %182 by %c241_i32_111 dim 1 : vector<8x256xf32>, i32 -> vector<8x256xf32>
    %471 = vector.broadcast %468 : vector<8x1xf32> to vector<8x256xf32>
    %472 = arith.mulf %470, %471 : vector<8x256xf32>
    %c241_i32_112 = arith.constant 241 : i32
    %473 = tpu.dynamic_rotate %232 by %c241_i32_112 dim 1 : vector<8x256xf32>, i32 -> vector<8x256xf32>
    %474 = vector.broadcast %469 : vector<8x1xf32> to vector<8x256xf32>
    %475 = arith.mulf %473, %474 : vector<8x256xf32>
    %476 = arith.addf %472, %475 : vector<8x256xf32>
    %c241_i32_113 = arith.constant 241 : i32
    %477 = tpu.dynamic_rotate %340 by %c241_i32_113 dim 1 : vector<8x256xf32>, i32 -> vector<8x256xf32>
    %478 = vector.broadcast %468 : vector<8x1xf32> to vector<8x256xf32>
    %479 = arith.mulf %477, %478 : vector<8x256xf32>
    %c241_i32_114 = arith.constant 241 : i32
    %480 = tpu.dynamic_rotate %345 by %c241_i32_114 dim 1 : vector<8x256xf32>, i32 -> vector<8x256xf32>
    %481 = vector.broadcast %469 : vector<8x1xf32> to vector<8x256xf32>
    %482 = arith.mulf %480, %481 : vector<8x256xf32>
    %483 = arith.addf %479, %482 : vector<8x256xf32>
    %484 = vector.broadcast %132 : vector<1x256xf32> to vector<8x256xf32>
    %485 = arith.mulf %476, %484 : vector<8x256xf32>
    %486 = vector.broadcast %132 : vector<1x256xf32> to vector<8x256xf32>
    %487 = arith.mulf %483, %486 : vector<8x256xf32>
    %488 = arith.addf %466, %485 : vector<8x256xf32>
    %489 = arith.addf %467, %487 : vector<8x256xf32>
    %490 = vector.extract_strided_slice %186 {offsets = [0, 25], sizes = [8, 1], strides = [1, 1]} : vector<8x36xf32> to vector<8x1xf32>
    %491 = vector.extract_strided_slice %186 {offsets = [0, 34], sizes = [8, 1], strides = [1, 1]} : vector<8x36xf32> to vector<8x1xf32>
    %c240_i32_115 = arith.constant 240 : i32
    %492 = tpu.dynamic_rotate %182 by %c240_i32_115 dim 1 : vector<8x256xf32>, i32 -> vector<8x256xf32>
    %493 = vector.broadcast %490 : vector<8x1xf32> to vector<8x256xf32>
    %494 = arith.mulf %492, %493 : vector<8x256xf32>
    %c240_i32_116 = arith.constant 240 : i32
    %495 = tpu.dynamic_rotate %232 by %c240_i32_116 dim 1 : vector<8x256xf32>, i32 -> vector<8x256xf32>
    %496 = vector.broadcast %491 : vector<8x1xf32> to vector<8x256xf32>
    %497 = arith.mulf %495, %496 : vector<8x256xf32>
    %498 = arith.addf %494, %497 : vector<8x256xf32>
    %c240_i32_117 = arith.constant 240 : i32
    %499 = tpu.dynamic_rotate %340 by %c240_i32_117 dim 1 : vector<8x256xf32>, i32 -> vector<8x256xf32>
    %500 = vector.broadcast %490 : vector<8x1xf32> to vector<8x256xf32>
    %501 = arith.mulf %499, %500 : vector<8x256xf32>
    %c240_i32_118 = arith.constant 240 : i32
    %502 = tpu.dynamic_rotate %345 by %c240_i32_118 dim 1 : vector<8x256xf32>, i32 -> vector<8x256xf32>
    %503 = vector.broadcast %491 : vector<8x1xf32> to vector<8x256xf32>
    %504 = arith.mulf %502, %503 : vector<8x256xf32>
    %505 = arith.addf %501, %504 : vector<8x256xf32>
    %506 = vector.broadcast %153 : vector<1x256xf32> to vector<8x256xf32>
    %507 = arith.mulf %498, %506 : vector<8x256xf32>
    %508 = vector.broadcast %153 : vector<1x256xf32> to vector<8x256xf32>
    %509 = arith.mulf %505, %508 : vector<8x256xf32>
    %510 = arith.addf %488, %507 : vector<8x256xf32>
    %511 = arith.addf %489, %509 : vector<8x256xf32>
    %512 = vector.extract_strided_slice %186 {offsets = [0, 26], sizes = [8, 1], strides = [1, 1]} : vector<8x36xf32> to vector<8x1xf32>
    %513 = vector.extract_strided_slice %186 {offsets = [0, 35], sizes = [8, 1], strides = [1, 1]} : vector<8x36xf32> to vector<8x1xf32>
    %c239_i32_119 = arith.constant 239 : i32
    %514 = tpu.dynamic_rotate %182 by %c239_i32_119 dim 1 : vector<8x256xf32>, i32 -> vector<8x256xf32>
    %515 = vector.broadcast %512 : vector<8x1xf32> to vector<8x256xf32>
    %516 = arith.mulf %514, %515 : vector<8x256xf32>
    %c239_i32_120 = arith.constant 239 : i32
    %517 = tpu.dynamic_rotate %232 by %c239_i32_120 dim 1 : vector<8x256xf32>, i32 -> vector<8x256xf32>
    %518 = vector.broadcast %513 : vector<8x1xf32> to vector<8x256xf32>
    %519 = arith.mulf %517, %518 : vector<8x256xf32>
    %520 = arith.addf %516, %519 : vector<8x256xf32>
    %c239_i32_121 = arith.constant 239 : i32
    %521 = tpu.dynamic_rotate %340 by %c239_i32_121 dim 1 : vector<8x256xf32>, i32 -> vector<8x256xf32>
    %522 = vector.broadcast %512 : vector<8x1xf32> to vector<8x256xf32>
    %523 = arith.mulf %521, %522 : vector<8x256xf32>
    %c239_i32_122 = arith.constant 239 : i32
    %524 = tpu.dynamic_rotate %345 by %c239_i32_122 dim 1 : vector<8x256xf32>, i32 -> vector<8x256xf32>
    %525 = vector.broadcast %513 : vector<8x1xf32> to vector<8x256xf32>
    %526 = arith.mulf %524, %525 : vector<8x256xf32>
    %527 = arith.addf %523, %526 : vector<8x256xf32>
    %528 = vector.broadcast %174 : vector<1x256xf32> to vector<8x256xf32>
    %529 = arith.mulf %520, %528 : vector<8x256xf32>
    %530 = vector.broadcast %174 : vector<1x256xf32> to vector<8x256xf32>
    %531 = arith.mulf %527, %530 : vector<8x256xf32>
    %532 = arith.addf %510, %529 : vector<8x256xf32>
    %533 = arith.addf %511, %531 : vector<8x256xf32>
    %cst_123 = arith.constant 1.000000e-16 : f32
    %534 = vector.broadcast %cst_123 : f32 to vector<8x256xf32>
    %535 = arith.addf %532, %534 : vector<8x256xf32>
    %536 = arith.mulf %227, %535 : vector<8x256xf32>
    %cst_124 = arith.constant 1.000000e-16 : f32
    %537 = vector.broadcast %cst_124 : f32 to vector<8x256xf32>
    %538 = arith.addf %533, %537 : vector<8x256xf32>
    %539 = arith.divf %536, %538 : vector<8x256xf32>
    %c0_125 = arith.constant 0 : index
    %c0_126 = arith.constant 0 : index
    %540 = vector.load %arg3[%c0_125, %c0_126] : memref<8x256xf32, #tpu.memory_space<vmem>>, vector<8x256xf32>
    tpu.vector_store %arg3[%c0_125, %c0_126], %539 {strides = array<i32>} : memref<8x256xf32, #tpu.memory_space<vmem>>, vector<8x256xf32>,
    return
  }
}

</mosaic_0001>

<llo_original>
// kernel: _deconv_forward_impl.1
$region0: #{_deconv_forward_impl.1}
  #allocation0 [shape = 'u32[]', space=smem, size = 0x4, offset = 0x4, fixed_abs, tag = 'smem constant byte address 0x4 - core index']
  #allocation1 [shape = 'u32[72,128]{1,0:T(1,128)}', space=vmem, size = 0x9000, scoped, tag = 'internal scratch']
  %s0 = inlined_call_operand.vmem [shape: f32[8,256], index: 0, kind: input, shape index: {}]
  %s1 = inlined_call_operand.vmem [shape: f32[8,36], index: 1, kind: input, shape index: {}]
  %s2 = inlined_call_operand.vmem [shape: f32[8,5], index: 2, kind: input, shape index: {}]
  %s3 = inlined_call_operand.vmem [shape: f32[8,256], index: 3, kind: output, shape index: {}]
  %s4 = sld [smem:[#allocation0]]
  $region22: #{_deconv_forward_impl.1} parent=0
    _
  %s6 = ssub.s32 1, %s4
  %s7 = scalar_select 0, %s6, %s4
  // Predicated region
  $region2: #{_deconv_forward_impl.1} parent=0 // pred_check
    _
  $region3: #{_deconv_forward_impl.1} parent=0 // pred_check_branch
    %9 = sbr.rel (0) target = $region5
  $region4: #{_deconv_forward_impl.1} parent=0 // pred_region
    _
  $region5: #{_deconv_forward_impl.1} parent=0 // pred_fallthru
    _
  // Predicated region
  $region6: #{_deconv_forward_impl.1} parent=0 // pred_check
    _
  $region7: #{_deconv_forward_impl.1} parent=0 // pred_check_branch
    %11 = sbr.rel (0) target = $region9
  $region8: #{_deconv_forward_impl.1} parent=0 // pred_region
    _
  $region9: #{_deconv_forward_impl.1} parent=0 // pred_fallthru
    _
  // Predicated region
  $region10: #{_deconv_forward_impl.1} parent=0 // pred_check
    _
  $region11: #{_deconv_forward_impl.1} parent=0 // pred_check_branch
    %13 = sbr.rel (0) target = $region13
  $region12: #{_deconv_forward_impl.1} parent=0 // pred_region
    _
  $region13: #{_deconv_forward_impl.1} parent=0 // pred_fallthru
    _
  %v14 = vlaneseq
  %v15 = vand.u32 %v14, 127
  %v16 = vadd.s32 %v15, 128
  %v17 = vand.u32 %v15, 15
  %v18 = vand.u32 %v16, 15
  %v19 = vshra.s32 %v15, 4
  %v20 = vshra.s32 %v16, 4
  %v21 = vand.u32 %v19, 15
  %v22 = vand.u32 %v20, 15
  %v23 = vadd.s32 %v17, 4294967295
  %v24 = vadd.s32 %v18, 4294967295
  %vm25 = vcmp.ge.s32.totalorder %v23, 0
  %vm26 = vcmp.ge.s32.totalorder %v24, 0
  %vm27 = vcmp.lt.s32.totalorder %v23, 16
  %vm28 = vcmp.lt.s32.totalorder %v24, 16
  %vm29 = vmand %vm25, %vm27
  %vm30 = vmand %vm26, %vm28
  %v31 = vadd.s32 %v21, 4294967295
  %v32 = vadd.s32 %v22, 4294967295
  %vm33 = vcmp.ge.s32.totalorder %v31, 0
  %vm34 = vcmp.ge.s32.totalorder %v32, 0
  %vm35 = vmand %vm29, %vm33
  %vm36 = vmand %vm30, %vm34
  %vm37 = vcmp.lt.s32.totalorder %v31, 16
  %vm38 = vcmp.lt.s32.totalorder %v32, 16
  %vm39 = vmand %vm35, %vm37
  %vm40 = vmand %vm36, %vm38
  %v41 = vsel %vm39, 1, 0
  %v42 = vsel %vm40, 1, 0
  %v43 = vcvt.s32.f32 %v41
  %v44 = vcvt.s32.f32 %v42
  %vm45 = vcmp.ge.s32.totalorder %v17, 0
  %vm46 = vcmp.ge.s32.totalorder %v18, 0
  %vm47 = vcmp.lt.s32.totalorder %v17, 16
  %vm48 = vcmp.lt.s32.totalorder %v18, 16
  %vm49 = vmand %vm45, %vm47
  %vm50 = vmand %vm46, %vm48
  %vm51 = vmand %vm49, %vm33
  %vm52 = vmand %vm50, %vm34
  %vm53 = vmand %vm51, %vm37
  %vm54 = vmand %vm52, %vm38
  %v55 = vsel %vm53, 1, 0
  %v56 = vsel %vm54, 1, 0
  %v57 = vcvt.s32.f32 %v55
  %v58 = vcvt.s32.f32 %v56
  %v59 = vadd.s32 %v17, 1
  %v60 = vadd.s32 %v18, 1
  %vm61 = vcmp.ge.s32.totalorder %v59, 0
  %vm62 = vcmp.ge.s32.totalorder %v60, 0
  %vm63 = vcmp.lt.s32.totalorder %v59, 16
  %vm64 = vcmp.lt.s32.totalorder %v60, 16
  %vm65 = vmand %vm61, %vm63
  %vm66 = vmand %vm62, %vm64
  %vm67 = vmand %vm65, %vm33
  %vm68 = vmand %vm66, %vm34
  %vm69 = vmand %vm67, %vm37
  %vm70 = vmand %vm68, %vm38
  %v71 = vsel %vm69, 1, 0
  %v72 = vsel %vm70, 1, 0
  %v73 = vcvt.s32.f32 %v71
  %v74 = vcvt.s32.f32 %v72
  %vm75 = vcmp.ge.s32.totalorder %v21, 0
  %vm76 = vcmp.ge.s32.totalorder %v22, 0
  %vm77 = vmand %vm29, %vm75
  %vm78 = vmand %vm30, %vm76
  %vm79 = vcmp.lt.s32.totalorder %v21, 16
  %vm80 = vcmp.lt.s32.totalorder %v22, 16
  %vm81 = vmand %vm77, %vm79
  %vm82 = vmand %vm78, %vm80
  %v83 = vsel %vm81, 1, 0
  %v84 = vsel %vm82, 1, 0
  %v85 = vcvt.s32.f32 %v83
  %v86 = vcvt.s32.f32 %v84
  %vm87 = vmand %vm65, %vm75
  %vm88 = vmand %vm66, %vm76
  %vm89 = vmand %vm87, %vm79
  %vm90 = vmand %vm88, %vm80
  %v91 = vsel %vm89, 1, 0
  %v92 = vsel %vm90, 1, 0
  %v93 = vcvt.s32.f32 %v91
  %v94 = vcvt.s32.f32 %v92
  %v95 = vadd.s32 %v21, 1
  %v96 = vadd.s32 %v22, 1
  %vm97 = vcmp.ge.s32.totalorder %v95, 0
  %vm98 = vcmp.ge.s32.totalorder %v96, 0
  %vm99 = vmand %vm29, %vm97
  %vm100 = vmand %vm30, %vm98
  %vm101 = vcmp.lt.s32.totalorder %v95, 16
  %vm102 = vcmp.lt.s32.totalorder %v96, 16
  %vm103 = vmand %vm99, %vm101
  %vm104 = vmand %vm100, %vm102
  %v105 = vsel %vm103, 1, 0
  %v106 = vsel %vm104, 1, 0
  %v107 = vcvt.s32.f32 %v105
  %v108 = vcvt.s32.f32 %v106
  %vm109 = vmand %vm49, %vm97
  %vm110 = vmand %vm50, %vm98
  %vm111 = vmand %vm109, %vm101
  %vm112 = vmand %vm110, %vm102
  %v113 = vsel %vm111, 1, 0
  %v114 = vsel %vm112, 1, 0
  %v115 = vcvt.s32.f32 %v113
  %v116 = vcvt.s32.f32 %v114
  %vm117 = vmand %vm65, %vm97
  %vm118 = vmand %vm66, %vm98
  %vm119 = vmand %vm117, %vm101
  %vm120 = vmand %vm118, %vm102
  %v121 = vsel %vm119, 1, 0
  %v122 = vsel %vm120, 1, 0
  %v123 = vcvt.s32.f32 %v121
  %v124 = vcvt.s32.f32 %v122
  %v125 = vlaneseq
  %v126 = vshrl.u32 %v125, 7
  %v127 = vand.u32 %v126, 3
  %v128 = vand.u32 %v126, 1
  %vm129 = vcmp.eq.s32.totalorder %v128, 0
  %v130 = vld [vmem:[%s0] sm:$0xff]
  %v131 = vld [vmem:[%s0 + $0x8] sm:$0xff]
  %v132 = vld [vmem:[%s2] sm:$0xff]
  %v133 = vld [vmem:[%s1] sm:$0xff]
  %v134 = vmax.f32 %v133, 0.0
  %136 = vset.pattern.permute.xlu0 0
  %137 = vperm.xlu0 %136, %v132
  %v138 = vpop.permute.xlu0 %137
  %v140 = vmul.f32 %v130, %v138
  %v141 = vmul.f32 %v131, %v138
  %142 = vset.pattern.permute.xlu0 4
  %143 = vperm.xlu0 %142, %v132
  %v144 = vpop.permute.xlu0 %143
  %v146 = vadd.f32 %v140, %v144
  %v147 = vadd.f32 %v141, %v144
  %vm148 = vcmp.ge.s32.totalorder %v127, 1
  %v149 = vrot.slane %v130, 7
  %v150 = vrot.slane %v131, 7
  %v151 = vrot.slane %v130, 3
  %v152 = vrot.slane %v131, 3
  %v153 = vsel %vm148, 1, 0
  %vm154 = vcmp.eq.s32.totalorder %v153, 1
  %v155 = vsel %vm154, %v149, %v151
  %v156 = vsel %vm154, %v150, %v152
  %157 = vset.pattern.permute.xlu0 1
  %158 = vperm.xlu0 %157, %v132
  %v159 = vpop.permute.xlu0 %158
  %v161 = vmul.f32 %v155, %v159
  %v162 = vmul.f32 %v156, %v159
  %v163 = vadd.f32 %v146, %v161
  %v164 = vadd.f32 %v147, %v162
  %vm165 = vcmp.ge.s32.totalorder %v127, 2
  %v166 = vrot.slane %v130, 6
  %v167 = vrot.slane %v131, 6
  %v168 = vrot.slane %v130, 2
  %v169 = vrot.slane %v131, 2
  %v170 = vsel %vm165, 1, 0
  %vm171 = vcmp.eq.s32.totalorder %v170, 1
  %v172 = vsel %vm171, %v166, %v168
  %v173 = vsel %vm171, %v167, %v169
  %174 = vset.pattern.permute.xlu0 2
  %175 = vperm.xlu0 %174, %v132
  %v176 = vpop.permute.xlu0 %175
  %v178 = vmul.f32 %v172, %v176
  %v179 = vmul.f32 %v173, %v176
  %v180 = vadd.f32 %v163, %v178
  %v181 = vadd.f32 %v164, %v179
  %vm182 = vcmp.ge.s32.totalorder %v127, 3
  %v183 = vrot.slane %v130, 5
  %v184 = vrot.slane %v131, 5
  %v185 = vrot.slane %v130, 1
  %v186 = vrot.slane %v131, 1
  %v187 = vsel %vm182, 1, 0
  %vm188 = vcmp.eq.s32.totalorder %v187, 1
  %v189 = vsel %vm188, %v183, %v185
  %v190 = vsel %vm188, %v184, %v186
  %191 = vset.pattern.permute.xlu0 3
  %192 = vperm.xlu0 %191, %v132
  %v193 = vpop.permute.xlu0 %192
  %v195 = vmul.f32 %v189, %v193
  %v196 = vmul.f32 %v190, %v193
  %v197 = vadd.f32 %v180, %v195
  %v198 = vadd.f32 %v181, %v196
  %v199 = vmax.f32 %v197, 0.0
  %v200 = vmax.f32 %v198, 0.0
  %v201 = vsel %vm129, 1, 0
  %vm202 = vcmp.eq.s32.totalorder %v201, 1
  %v203 = vsel %vm202, %v185, %v149
  %v204 = vsel %vm202, %v186, %v150
  %v205 = vrot.slane %v199, 1
  %v206 = vrot.slane %v200, 1
  %v207 = vrot.slane %v199, 7
  %v208 = vrot.slane %v200, 7
  %v209 = vsel %vm202, %v205, %v207
  %v210 = vsel %vm202, %v206, %v208
  %211 = vrot.lane.b32.xlu0 %v199, 17
  %v212 = vpop.permute.xlu0 %211
  %213 = vrot.lane.b32.xlu0 %v200, 17
  %v214 = vpop.permute.xlu0 %213
  %vm215 = vcmp.lt.s32.totalorder %v15, 17
  %v216 = vsel %vm215, %v212, %v214
  %v217 = vsel %vm215, %v214, %v212
  %219 = vset.pattern.permute.xlu0 0
  %220 = vperm.xlu0 %219, %v134
  %v221 = vpop.permute.xlu0 %220
  %v223 = vmul.f32 %v217, %v221
  %v224 = vmul.f32 %v216, %v221
  %225 = vrot.lane.b32.xlu0 %v209, 17
  %v226 = vpop.permute.xlu0 %225
  %227 = vrot.lane.b32.xlu0 %v210, 17
  %v228 = vpop.permute.xlu0 %227
  %v229 = vsel %vm215, %v226, %v228
  %v230 = vsel %vm215, %v228, %v226
  %231 = vset.pattern.permute.xlu0 9
  %232 = vperm.xlu0 %231, %v134
  %v233 = vpop.permute.xlu0 %232
  %v235 = vmul.f32 %v230, %v233
  %v236 = vmul.f32 %v229, %v233
  %v237 = vadd.f32 %v223, %v235
  %v238 = vadd.f32 %v224, %v236
  %v239 = vmul.f32 %v237, %v43
  %v240 = vmul.f32 %v238, %v44
  %241 = vrot.lane.b32.xlu0 %v199, 16
  %v242 = vpop.permute.xlu0 %241
  %243 = vrot.lane.b32.xlu0 %v200, 16
  %v244 = vpop.permute.xlu0 %243
  %vm245 = vcmp.lt.s32.totalorder %v15, 16
  %v246 = vsel %vm245, %v242, %v244
  %v247 = vsel %vm245, %v244, %v242
  %248 = vset.pattern.permute.xlu0 1
  %249 = vperm.xlu0 %248, %v134
  %v250 = vpop.permute.xlu0 %249
  %v252 = vmul.f32 %v247, %v250
  %v253 = vmul.f32 %v246, %v250
  %254 = vrot.lane.b32.xlu0 %v209, 16
  %v255 = vpop.permute.xlu0 %254
  %256 = vrot.lane.b32.xlu0 %v210, 16
  %v257 = vpop.permute.xlu0 %256
  %v258 = vsel %vm245, %v255, %v257
  %v259 = vsel %vm245, %v257, %v255
  %260 = vset.pattern.permute.xlu0 10
  %261 = vperm.xlu0 %260, %v134
  %v262 = vpop.permute.xlu0 %261
  %v264 = vmul.f32 %v259, %v262
  %v265 = vmul.f32 %v258, %v262
  %v266 = vadd.f32 %v252, %v264
  %v267 = vadd.f32 %v253, %v265
  %v268 = vmul.f32 %v266, %v57
  %v269 = vmul.f32 %v267, %v58
  %v270 = vadd.f32 %v239, %v268
  %v271 = vadd.f32 %v240, %v269
  %272 = vrot.lane.b32.xlu0 %v199, 15
  %v273 = vpop.permute.xlu0 %272
  %274 = vrot.lane.b32.xlu0 %v200, 15
  %v275 = vpop.permute.xlu0 %274
  %vm276 = vcmp.lt.s32.totalorder %v15, 15
  %v277 = vsel %vm276, %v273, %v275
  %v278 = vsel %vm276, %v275, %v273
  %279 = vset.pattern.permute.xlu0 2
  %280 = vperm.xlu0 %279, %v134
  %v281 = vpop.permute.xlu0 %280
  %v283 = vmul.f32 %v278, %v281
  %v284 = vmul.f32 %v277, %v281
  %285 = vrot.lane.b32.xlu0 %v209, 15
  %v286 = vpop.permute.xlu0 %285
  %287 = vrot.lane.b32.xlu0 %v210, 15
  %v288 = vpop.permute.xlu0 %287
  %v289 = vsel %vm276, %v286, %v288
  %v290 = vsel %vm276, %v288, %v286
  %291 = vset.pattern.permute.xlu0 11
  %292 = vperm.xlu0 %291, %v134
  %v293 = vpop.permute.xlu0 %292
  %v295 = vmul.f32 %v290, %v293
  %v296 = vmul.f32 %v289, %v293
  %v297 = vadd.f32 %v283, %v295
  %v298 = vadd.f32 %v284, %v296
  %v299 = vmul.f32 %v297, %v73
  %v300 = vmul.f32 %v298, %v74
  %v301 = vadd.f32 %v270, %v299
  %v302 = vadd.f32 %v271, %v300
  %303 = vrot.lane.b32.xlu0 %v199, 1
  %v304 = vpop.permute.xlu0 %303
  %305 = vrot.lane.b32.xlu0 %v200, 1
  %v306 = vpop.permute.xlu0 %305
  %vm307 = vcmp.lt.s32.totalorder %v15, 1
  %v308 = vsel %vm307, %v304, %v306
  %v309 = vsel %vm307, %v306, %v304
  %310 = vset.pattern.permute.xlu0 3
  %311 = vperm.xlu0 %310, %v134
  %v312 = vpop.permute.xlu0 %311
  %v314 = vmul.f32 %v309, %v312
  %v315 = vmul.f32 %v308, %v312
  %316 = vrot.lane.b32.xlu0 %v209, 1
  %v317 = vpop.permute.xlu0 %316
  %318 = vrot.lane.b32.xlu0 %v210, 1
  %v319 = vpop.permute.xlu0 %318
  %v320 = vsel %vm307, %v317, %v319
  %v321 = vsel %vm307, %v319, %v317
  %322 = vset.pattern.permute.xlu0 12
  %323 = vperm.xlu0 %322, %v134
  %v324 = vpop.permute.xlu0 %323
  %v326 = vmul.f32 %v321, %v324
  %v327 = vmul.f32 %v320, %v324
  %v328 = vadd.f32 %v314, %v326
  %v329 = vadd.f32 %v315, %v327
  %v330 = vmul.f32 %v328, %v85
  %v331 = vmul.f32 %v329, %v86
  %v332 = vadd.f32 %v301, %v330
  %v333 = vadd.f32 %v302, %v331
  %334 = vset.pattern.permute.xlu0 4
  %335 = vperm.xlu0 %334, %v134
  %v336 = vpop.permute.xlu0 %335
  %v338 = vmul.f32 %v199, %v336
  %v339 = vmul.f32 %v200, %v336
  %340 = vset.pattern.permute.xlu0 13
  %341 = vperm.xlu0 %340, %v134
  %v342 = vpop.permute.xlu0 %341
  %v344 = vmul.f32 %v209, %v342
  %v345 = vmul.f32 %v210, %v342
  %v346 = vadd.f32 %v338, %v344
  %v347 = vadd.f32 %v339, %v345
  %v348 = vadd.f32 %v332, %v346
  %v349 = vadd.f32 %v333, %v347
  %350 = vrot.lane.b32.xlu0 %v199, 127
  %v351 = vpop.permute.xlu0 %350
  %352 = vrot.lane.b32.xlu0 %v200, 127
  %v353 = vpop.permute.xlu0 %352
  %vm354 = vcmp.lt.s32.totalorder %v15, 127
  %v355 = vsel %vm354, %v351, %v353
  %v356 = vsel %vm354, %v353, %v351
  %357 = vset.pattern.permute.xlu0 5
  %358 = vperm.xlu0 %357, %v134
  %v359 = vpop.permute.xlu0 %358
  %v361 = vmul.f32 %v355, %v359
  %v362 = vmul.f32 %v356, %v359
  %363 = vrot.lane.b32.xlu0 %v209, 127
  %v364 = vpop.permute.xlu0 %363
  %365 = vrot.lane.b32.xlu0 %v210, 127
  %v366 = vpop.permute.xlu0 %365
  %v367 = vsel %vm354, %v364, %v366
  %v368 = vsel %vm354, %v366, %v364
  %369 = vset.pattern.permute.xlu0 14
  %370 = vperm.xlu0 %369, %v134
  %v371 = vpop.permute.xlu0 %370
  %v373 = vmul.f32 %v367, %v371
  %v374 = vmul.f32 %v368, %v371
  %v375 = vadd.f32 %v361, %v373
  %v376 = vadd.f32 %v362, %v374
  %v377 = vmul.f32 %v375, %v93
  %v378 = vmul.f32 %v376, %v94
  %v379 = vadd.f32 %v348, %v377
  %v380 = vadd.f32 %v349, %v378
  %381 = vrot.lane.b32.xlu0 %v199, 113
  %v382 = vpop.permute.xlu0 %381
  %383 = vrot.lane.b32.xlu0 %v200, 113
  %v384 = vpop.permute.xlu0 %383
  %vm385 = vcmp.lt.s32.totalorder %v15, 113
  %v386 = vsel %vm385, %v382, %v384
  %v387 = vsel %vm385, %v384, %v382
  %388 = vset.pattern.permute.xlu0 6
  %389 = vperm.xlu0 %388, %v134
  %v390 = vpop.permute.xlu0 %389
  %v392 = vmul.f32 %v386, %v390
  %v393 = vmul.f32 %v387, %v390
  %394 = vrot.lane.b32.xlu0 %v209, 113
  %v395 = vpop.permute.xlu0 %394
  %396 = vrot.lane.b32.xlu0 %v210, 113
  %v397 = vpop.permute.xlu0 %396
  %v398 = vsel %vm385, %v395, %v397
  %v399 = vsel %vm385, %v397, %v395
  %400 = vset.pattern.permute.xlu0 15
  %401 = vperm.xlu0 %400, %v134
  %v402 = vpop.permute.xlu0 %401
  %v404 = vmul.f32 %v398, %v402
  %v405 = vmul.f32 %v399, %v402
  %v406 = vadd.f32 %v392, %v404
  %v407 = vadd.f32 %v393, %v405
  %v408 = vmul.f32 %v406, %v107
  %v409 = vmul.f32 %v407, %v108
  %v410 = vadd.f32 %v379, %v408
  %v411 = vadd.f32 %v380, %v409
  %412 = vrot.lane.b32.xlu0 %v199, 112
  %v413 = vpop.permute.xlu0 %412
  %414 = vrot.lane.b32.xlu0 %v200, 112
  %v415 = vpop.permute.xlu0 %414
  %vm416 = vcmp.lt.s32.totalorder %v15, 112
  %v417 = vsel %vm416, %v413, %v415
  %v418 = vsel %vm416, %v415, %v413
  %419 = vset.pattern.permute.xlu0 7
  %420 = vperm.xlu0 %419, %v134
  %v421 = vpop.permute.xlu0 %420
  %v423 = vmul.f32 %v417, %v421
  %v424 = vmul.f32 %v418, %v421
  %425 = vrot.lane.b32.xlu0 %v209, 112
  %v426 = vpop.permute.xlu0 %425
  %427 = vrot.lane.b32.xlu0 %v210, 112
  %v428 = vpop.permute.xlu0 %427
  %v429 = vsel %vm416, %v426, %v428
  %v430 = vsel %vm416, %v428, %v426
  %431 = vset.pattern.permute.xlu0 16
  %432 = vperm.xlu0 %431, %v134
  %v433 = vpop.permute.xlu0 %432
  %v435 = vmul.f32 %v429, %v433
  %v436 = vmul.f32 %v430, %v433
  %v437 = vadd.f32 %v423, %v435
  %v438 = vadd.f32 %v424, %v436
  %v439 = vmul.f32 %v437, %v115
  %v440 = vmul.f32 %v438, %v116
  %v441 = vadd.f32 %v410, %v439
  %v442 = vadd.f32 %v411, %v440
  %443 = vrot.lane.b32.xlu0 %v199, 111
  %v444 = vpop.permute.xlu0 %443
  %445 = vrot.lane.b32.xlu0 %v200, 111
  %v446 = vpop.permute.xlu0 %445
  %vm447 = vcmp.lt.s32.totalorder %v15, 111
  %v448 = vsel %vm447, %v444, %v446
  %v449 = vsel %vm447, %v446, %v444
  %450 = vset.pattern.permute.xlu0 8
  %451 = vperm.xlu0 %450, %v134
  %v452 = vpop.permute.xlu0 %451
  %v454 = vmul.f32 %v448, %v452
  %v455 = vmul.f32 %v449, %v452
  %456 = vrot.lane.b32.xlu0 %v209, 111
  %v457 = vpop.permute.xlu0 %456
  %458 = vrot.lane.b32.xlu0 %v210, 111
  %v459 = vpop.permute.xlu0 %458
  %v460 = vsel %vm447, %v457, %v459
  %v461 = vsel %vm447, %v459, %v457
  %462 = vset.pattern.permute.xlu0 17
  %463 = vperm.xlu0 %462, %v134
  %v464 = vpop.permute.xlu0 %463
  %v466 = vmul.f32 %v460, %v464
  %v467 = vmul.f32 %v461, %v464
  %v468 = vadd.f32 %v454, %v466
  %v469 = vadd.f32 %v455, %v467
  %v470 = vmul.f32 %v468, %v123
  %v471 = vmul.f32 %v469, %v124
  %v472 = vadd.f32 %v441, %v470
  %v473 = vadd.f32 %v442, %v471
  %v474 = vrot.slane %v472, 1
  %v475 = vrot.slane %v473, 1
  %v476 = vrot.slane %v472, 7
  %v477 = vrot.slane %v473, 7
  %v478 = vsel %vm202, %v474, %v476
  %v479 = vsel %vm202, %v475, %v477
  %480 = vrot.lane.b32.xlu0 %v130, 17
  %v481 = vpop.permute.xlu0 %480
  %482 = vrot.lane.b32.xlu0 %v131, 17
  %v483 = vpop.permute.xlu0 %482
  %v484 = vsel %vm215, %v481, %v483
  %v485 = vsel %vm215, %v483, %v481
  %486 = vset.pattern.permute.xlu0 18
  %487 = vperm.xlu0 %486, %v134
  %v488 = vpop.permute.xlu0 %487
  %v490 = vmul.f32 %v485, %v488
  %v491 = vmul.f32 %v484, %v488
  %492 = vrot.lane.b32.xlu0 %v203, 17
  %v493 = vpop.permute.xlu0 %492
  %494 = vrot.lane.b32.xlu0 %v204, 17
  %v495 = vpop.permute.xlu0 %494
  %v496 = vsel %vm215, %v493, %v495
  %v497 = vsel %vm215, %v495, %v493
  %498 = vset.pattern.permute.xlu0 27
  %499 = vperm.xlu0 %498, %v134
  %v500 = vpop.permute.xlu0 %499
  %v502 = vmul.f32 %v497, %v500
  %v503 = vmul.f32 %v496, %v500
  %v504 = vadd.f32 %v490, %v502
  %v505 = vadd.f32 %v491, %v503
  %506 = vrot.lane.b32.xlu0 %v472, 17
  %v507 = vpop.permute.xlu0 %506
  %508 = vrot.lane.b32.xlu0 %v473, 17
  %v509 = vpop.permute.xlu0 %508
  %v510 = vsel %vm215, %v507, %v509
  %v511 = vsel %vm215, %v509, %v507
  %v512 = vmul.f32 %v511, %v488
  %v513 = vmul.f32 %v510, %v488
  %514 = vrot.lane.b32.xlu0 %v478, 17
  %v515 = vpop.permute.xlu0 %514
  %516 = vrot.lane.b32.xlu0 %v479, 17
  %v517 = vpop.permute.xlu0 %516
  %v518 = vsel %vm215, %v515, %v517
  %v519 = vsel %vm215, %v517, %v515
  %v520 = vmul.f32 %v519, %v500
  %v521 = vmul.f32 %v518, %v500
  %v522 = vadd.f32 %v512, %v520
  %v523 = vadd.f32 %v513, %v521
  %v524 = vmul.f32 %v504, %v43
  %v525 = vmul.f32 %v505, %v44
  %v526 = vmul.f32 %v522, %v43
  %v527 = vmul.f32 %v523, %v44
  %528 = vrot.lane.b32.xlu0 %v130, 16
  %v529 = vpop.permute.xlu0 %528
  %530 = vrot.lane.b32.xlu0 %v131, 16
  %v531 = vpop.permute.xlu0 %530
  %v532 = vsel %vm245, %v529, %v531
  %v533 = vsel %vm245, %v531, %v529
  %534 = vset.pattern.permute.xlu0 19
  %535 = vperm.xlu0 %534, %v134
  %v536 = vpop.permute.xlu0 %535
  %v538 = vmul.f32 %v533, %v536
  %v539 = vmul.f32 %v532, %v536
  %540 = vrot.lane.b32.xlu0 %v203, 16
  %v541 = vpop.permute.xlu0 %540
  %542 = vrot.lane.b32.xlu0 %v204, 16
  %v543 = vpop.permute.xlu0 %542
  %v544 = vsel %vm245, %v541, %v543
  %v545 = vsel %vm245, %v543, %v541
  %546 = vset.pattern.permute.xlu0 28
  %547 = vperm.xlu0 %546, %v134
  %v548 = vpop.permute.xlu0 %547
  %v550 = vmul.f32 %v545, %v548
  %v551 = vmul.f32 %v544, %v548
  %v552 = vadd.f32 %v538, %v550
  %v553 = vadd.f32 %v539, %v551
  %554 = vrot.lane.b32.xlu0 %v472, 16
  %v555 = vpop.permute.xlu0 %554
  %556 = vrot.lane.b32.xlu0 %v473, 16
  %v557 = vpop.permute.xlu0 %556
  %v558 = vsel %vm245, %v555, %v557
  %v559 = vsel %vm245, %v557, %v555
  %v560 = vmul.f32 %v559, %v536
  %v561 = vmul.f32 %v558, %v536
  %562 = vrot.lane.b32.xlu0 %v478, 16
  %v563 = vpop.permute.xlu0 %562
  %564 = vrot.lane.b32.xlu0 %v479, 16
  %v565 = vpop.permute.xlu0 %564
  %v566 = vsel %vm245, %v563, %v565
  %v567 = vsel %vm245, %v565, %v563
  %v568 = vmul.f32 %v567, %v548
  %v569 = vmul.f32 %v566, %v548
  %v570 = vadd.f32 %v560, %v568
  %v571 = vadd.f32 %v561, %v569
  %v572 = vmul.f32 %v552, %v57
  %v573 = vmul.f32 %v553, %v58
  %v574 = vmul.f32 %v570, %v57
  %v575 = vmul.f32 %v571, %v58
  %v576 = vadd.f32 %v524, %v572
  %v577 = vadd.f32 %v525, %v573
  %v578 = vadd.f32 %v526, %v574
  %v579 = vadd.f32 %v527, %v575
  %580 = vrot.lane.b32.xlu0 %v130, 15
  %v581 = vpop.permute.xlu0 %580
  %582 = vrot.lane.b32.xlu0 %v131, 15
  %v583 = vpop.permute.xlu0 %582
  %v584 = vsel %vm276, %v581, %v583
  %v585 = vsel %vm276, %v583, %v581
  %586 = vset.pattern.permute.xlu0 20
  %587 = vperm.xlu0 %586, %v134
  %v588 = vpop.permute.xlu0 %587
  %v590 = vmul.f32 %v585, %v588
  %v591 = vmul.f32 %v584, %v588
  %592 = vrot.lane.b32.xlu0 %v203, 15
  %v593 = vpop.permute.xlu0 %592
  %594 = vrot.lane.b32.xlu0 %v204, 15
  %v595 = vpop.permute.xlu0 %594
  %v596 = vsel %vm276, %v593, %v595
  %v597 = vsel %vm276, %v595, %v593
  %598 = vset.pattern.permute.xlu0 29
  %599 = vperm.xlu0 %598, %v134
  %v600 = vpop.permute.xlu0 %599
  %v602 = vmul.f32 %v597, %v600
  %v603 = vmul.f32 %v596, %v600
  %v604 = vadd.f32 %v590, %v602
  %v605 = vadd.f32 %v591, %v603
  %606 = vrot.lane.b32.xlu0 %v472, 15
  %v607 = vpop.permute.xlu0 %606
  %608 = vrot.lane.b32.xlu0 %v473, 15
  %v609 = vpop.permute.xlu0 %608
  %v610 = vsel %vm276, %v607, %v609
  %v611 = vsel %vm276, %v609, %v607
  %v612 = vmul.f32 %v611, %v588
  %v613 = vmul.f32 %v610, %v588
  %614 = vrot.lane.b32.xlu0 %v478, 15
  %v615 = vpop.permute.xlu0 %614
  %616 = vrot.lane.b32.xlu0 %v479, 15
  %v617 = vpop.permute.xlu0 %616
  %v618 = vsel %vm276, %v615, %v617
  %v619 = vsel %vm276, %v617, %v615
  %v620 = vmul.f32 %v619, %v600
  %v621 = vmul.f32 %v618, %v600
  %v622 = vadd.f32 %v612, %v620
  %v623 = vadd.f32 %v613, %v621
  %v624 = vmul.f32 %v604, %v73
  %v625 = vmul.f32 %v605, %v74
  %v626 = vmul.f32 %v622, %v73
  %v627 = vmul.f32 %v623, %v74
  %v628 = vadd.f32 %v576, %v624
  %v629 = vadd.f32 %v577, %v625
  %v630 = vadd.f32 %v578, %v626
  %v631 = vadd.f32 %v579, %v627
  %632 = vrot.lane.b32.xlu0 %v130, 1
  %v633 = vpop.permute.xlu0 %632
  %634 = vrot.lane.b32.xlu0 %v131, 1
  %v635 = vpop.permute.xlu0 %634
  %v636 = vsel %vm307, %v633, %v635
  %v637 = vsel %vm307, %v635, %v633
  %638 = vset.pattern.permute.xlu0 21
  %639 = vperm.xlu0 %638, %v134
  %v640 = vpop.permute.xlu0 %639
  %v642 = vmul.f32 %v637, %v640
  %v643 = vmul.f32 %v636, %v640
  %644 = vrot.lane.b32.xlu0 %v203, 1
  %v645 = vpop.permute.xlu0 %644
  %646 = vrot.lane.b32.xlu0 %v204, 1
  %v647 = vpop.permute.xlu0 %646
  %v648 = vsel %vm307, %v645, %v647
  %v649 = vsel %vm307, %v647, %v645
  %650 = vset.pattern.permute.xlu0 30
  %651 = vperm.xlu0 %650, %v134
  %v652 = vpop.permute.xlu0 %651
  %v654 = vmul.f32 %v649, %v652
  %v655 = vmul.f32 %v648, %v652
  %v656 = vadd.f32 %v642, %v654
  %v657 = vadd.f32 %v643, %v655
  %658 = vrot.lane.b32.xlu0 %v472, 1
  %v659 = vpop.permute.xlu0 %658
  %660 = vrot.lane.b32.xlu0 %v473, 1
  %v661 = vpop.permute.xlu0 %660
  %v662 = vsel %vm307, %v659, %v661
  %v663 = vsel %vm307, %v661, %v659
  %v664 = vmul.f32 %v663, %v640
  %v665 = vmul.f32 %v662, %v640
  %666 = vrot.lane.b32.xlu0 %v478, 1
  %v667 = vpop.permute.xlu0 %666
  %668 = vrot.lane.b32.xlu0 %v479, 1
  %v669 = vpop.permute.xlu0 %668
  %v670 = vsel %vm307, %v667, %v669
  %v671 = vsel %vm307, %v669, %v667
  %v672 = vmul.f32 %v671, %v652
  %v673 = vmul.f32 %v670, %v652
  %v674 = vadd.f32 %v664, %v672
  %v675 = vadd.f32 %v665, %v673
  %v676 = vmul.f32 %v656, %v85
  %v677 = vmul.f32 %v657, %v86
  %v678 = vmul.f32 %v674, %v85
  %v679 = vmul.f32 %v675, %v86
  %v680 = vadd.f32 %v628, %v676
  %v681 = vadd.f32 %v629, %v677
  %v682 = vadd.f32 %v630, %v678
  %v683 = vadd.f32 %v631, %v679
  %684 = vset.pattern.permute.xlu0 22
  %685 = vperm.xlu0 %684, %v134
  %v686 = vpop.permute.xlu0 %685
  %v688 = vmul.f32 %v130, %v686
  %v689 = vmul.f32 %v131, %v686
  %690 = vset.pattern.permute.xlu0 31
  %691 = vperm.xlu0 %690, %v134
  %v692 = vpop.permute.xlu0 %691
  %v694 = vmul.f32 %v203, %v692
  %v695 = vmul.f32 %v204, %v692
  %v696 = vadd.f32 %v688, %v694
  %v697 = vadd.f32 %v689, %v695
  %v698 = vmul.f32 %v472, %v686
  %v699 = vmul.f32 %v473, %v686
  %v700 = vmul.f32 %v478, %v692
  %v701 = vmul.f32 %v479, %v692
  %v702 = vadd.f32 %v698, %v700
  %v703 = vadd.f32 %v699, %v701
  %v704 = vadd.f32 %v680, %v696
  %v705 = vadd.f32 %v681, %v697
  %v706 = vadd.f32 %v682, %v702
  %v707 = vadd.f32 %v683, %v703
  %708 = vrot.lane.b32.xlu0 %v130, 127
  %v709 = vpop.permute.xlu0 %708
  %710 = vrot.lane.b32.xlu0 %v131, 127
  %v711 = vpop.permute.xlu0 %710
  %v712 = vsel %vm354, %v709, %v711
  %v713 = vsel %vm354, %v711, %v709
  %714 = vset.pattern.permute.xlu0 23
  %715 = vperm.xlu0 %714, %v134
  %v716 = vpop.permute.xlu0 %715
  %v718 = vmul.f32 %v712, %v716
  %v719 = vmul.f32 %v713, %v716
  %720 = vrot.lane.b32.xlu0 %v203, 127
  %v721 = vpop.permute.xlu0 %720
  %722 = vrot.lane.b32.xlu0 %v204, 127
  %v723 = vpop.permute.xlu0 %722
  %v724 = vsel %vm354, %v721, %v723
  %v725 = vsel %vm354, %v723, %v721
  %726 = vset.pattern.permute.xlu0 32
  %727 = vperm.xlu0 %726, %v134
  %v728 = vpop.permute.xlu0 %727
  %v730 = vmul.f32 %v724, %v728
  %v731 = vmul.f32 %v725, %v728
  %v732 = vadd.f32 %v718, %v730
  %v733 = vadd.f32 %v719, %v731
  %734 = vrot.lane.b32.xlu0 %v472, 127
  %v735 = vpop.permute.xlu0 %734
  %736 = vrot.lane.b32.xlu0 %v473, 127
  %v737 = vpop.permute.xlu0 %736
  %v738 = vsel %vm354, %v735, %v737
  %v739 = vsel %vm354, %v737, %v735
  %v740 = vmul.f32 %v738, %v716
  %v741 = vmul.f32 %v739, %v716
  %742 = vrot.lane.b32.xlu0 %v478, 127
  %v743 = vpop.permute.xlu0 %742
  %744 = vrot.lane.b32.xlu0 %v479, 127
  %v745 = vpop.permute.xlu0 %744
  %v746 = vsel %vm354, %v743, %v745
  %v747 = vsel %vm354, %v745, %v743
  %v748 = vmul.f32 %v746, %v728
  %v749 = vmul.f32 %v747, %v728
  %v750 = vadd.f32 %v740, %v748
  %v751 = vadd.f32 %v741, %v749
  %v752 = vmul.f32 %v732, %v93
  %v753 = vmul.f32 %v733, %v94
  %v754 = vmul.f32 %v750, %v93
  %v755 = vmul.f32 %v751, %v94
  %v756 = vadd.f32 %v704, %v752
  %v757 = vadd.f32 %v705, %v753
  %v758 = vadd.f32 %v706, %v754
  %v759 = vadd.f32 %v707, %v755
  %760 = vrot.lane.b32.xlu0 %v130, 113
  %v761 = vpop.permute.xlu0 %760
  %762 = vrot.lane.b32.xlu0 %v131, 113
  %v763 = vpop.permute.xlu0 %762
  %v764 = vsel %vm385, %v761, %v763
  %v765 = vsel %vm385, %v763, %v761
  %766 = vset.pattern.permute.xlu0 24
  %767 = vperm.xlu0 %766, %v134
  %v768 = vpop.permute.xlu0 %767
  %v770 = vmul.f32 %v764, %v768
  %v771 = vmul.f32 %v765, %v768
  %772 = vrot.lane.b32.xlu0 %v203, 113
  %v773 = vpop.permute.xlu0 %772
  %774 = vrot.lane.b32.xlu0 %v204, 113
  %v775 = vpop.permute.xlu0 %774
  %v776 = vsel %vm385, %v773, %v775
  %v777 = vsel %vm385, %v775, %v773
  %778 = vset.pattern.permute.xlu0 33
  %779 = vperm.xlu0 %778, %v134
  %v780 = vpop.permute.xlu0 %779
  %v782 = vmul.f32 %v776, %v780
  %v783 = vmul.f32 %v777, %v780
  %v784 = vadd.f32 %v770, %v782
  %v785 = vadd.f32 %v771, %v783
  %786 = vrot.lane.b32.xlu0 %v472, 113
  %v787 = vpop.permute.xlu0 %786
  %788 = vrot.lane.b32.xlu0 %v473, 113
  %v789 = vpop.permute.xlu0 %788
  %v790 = vsel %vm385, %v787, %v789
  %v791 = vsel %vm385, %v789, %v787
  %v792 = vmul.f32 %v790, %v768
  %v793 = vmul.f32 %v791, %v768
  %794 = vrot.lane.b32.xlu0 %v478, 113
  %v795 = vpop.permute.xlu0 %794
  %796 = vrot.lane.b32.xlu0 %v479, 113
  %v797 = vpop.permute.xlu0 %796
  %v798 = vsel %vm385, %v795, %v797
  %v799 = vsel %vm385, %v797, %v795
  %v800 = vmul.f32 %v798, %v780
  %v801 = vmul.f32 %v799, %v780
  %v802 = vadd.f32 %v792, %v800
  %v803 = vadd.f32 %v793, %v801
  %v804 = vmul.f32 %v784, %v107
  %v805 = vmul.f32 %v785, %v108
  %v806 = vmul.f32 %v802, %v107
  %v807 = vmul.f32 %v803, %v108
  %v808 = vadd.f32 %v756, %v804
  %v809 = vadd.f32 %v757, %v805
  %v810 = vadd.f32 %v758, %v806
  %v811 = vadd.f32 %v759, %v807
  %812 = vrot.lane.b32.xlu0 %v130, 112
  %v813 = vpop.permute.xlu0 %812
  %814 = vrot.lane.b32.xlu0 %v131, 112
  %v815 = vpop.permute.xlu0 %814
  %v816 = vsel %vm416, %v813, %v815
  %v817 = vsel %vm416, %v815, %v813
  %818 = vset.pattern.permute.xlu0 25
  %819 = vperm.xlu0 %818, %v134
  %v820 = vpop.permute.xlu0 %819
  %v822 = vmul.f32 %v816, %v820
  %v823 = vmul.f32 %v817, %v820
  %824 = vrot.lane.b32.xlu0 %v203, 112
  %v825 = vpop.permute.xlu0 %824
  %826 = vrot.lane.b32.xlu0 %v204, 112
  %v827 = vpop.permute.xlu0 %826
  %v828 = vsel %vm416, %v825, %v827
  %v829 = vsel %vm416, %v827, %v825
  %830 = vset.pattern.permute.xlu0 34
  %831 = vperm.xlu0 %830, %v134
  %v832 = vpop.permute.xlu0 %831
  %v834 = vmul.f32 %v828, %v832
  %v835 = vmul.f32 %v829, %v832
  %v836 = vadd.f32 %v822, %v834
  %v837 = vadd.f32 %v823, %v835
  %838 = vrot.lane.b32.xlu0 %v472, 112
  %v839 = vpop.permute.xlu0 %838
  %840 = vrot.lane.b32.xlu0 %v473, 112
  %v841 = vpop.permute.xlu0 %840
  %v842 = vsel %vm416, %v839, %v841
  %v843 = vsel %vm416, %v841, %v839
  %v844 = vmul.f32 %v842, %v820
  %v845 = vmul.f32 %v843, %v820
  %846 = vrot.lane.b32.xlu0 %v478, 112
  %v847 = vpop.permute.xlu0 %846
  %848 = vrot.lane.b32.xlu0 %v479, 112
  %v849 = vpop.permute.xlu0 %848
  %v850 = vsel %vm416, %v847, %v849
  %v851 = vsel %vm416, %v849, %v847
  %v852 = vmul.f32 %v850, %v832
  %v853 = vmul.f32 %v851, %v832
  %v854 = vadd.f32 %v844, %v852
  %v855 = vadd.f32 %v845, %v853
  %v856 = vmul.f32 %v836, %v115
  %v857 = vmul.f32 %v837, %v116
  %v858 = vmul.f32 %v854, %v115
  %v859 = vmul.f32 %v855, %v116
  %v860 = vadd.f32 %v808, %v856
  %v861 = vadd.f32 %v809, %v857
  %v862 = vadd.f32 %v810, %v858
  %v863 = vadd.f32 %v811, %v859
  %864 = vrot.lane.b32.xlu0 %v130, 111
  %v865 = vpop.permute.xlu0 %864
  %866 = vrot.lane.b32.xlu0 %v131, 111
  %v867 = vpop.permute.xlu0 %866
  %v868 = vsel %vm447, %v865, %v867
  %v869 = vsel %vm447, %v867, %v865
  %870 = vset.pattern.permute.xlu0 26
  %871 = vperm.xlu0 %870, %v134
  %v872 = vpop.permute.xlu0 %871
  %v874 = vmul.f32 %v868, %v872
  %v875 = vmul.f32 %v869, %v872
  %876 = vrot.lane.b32.xlu0 %v203, 111
  %v877 = vpop.permute.xlu0 %876
  %878 = vrot.lane.b32.xlu0 %v204, 111
  %v879 = vpop.permute.xlu0 %878
  %v880 = vsel %vm447, %v877, %v879
  %v881 = vsel %vm447, %v879, %v877
  %882 = vset.pattern.permute.xlu0 35
  %883 = vperm.xlu0 %882, %v134
  %v884 = vpop.permute.xlu0 %883
  %v886 = vmul.f32 %v880, %v884
  %v887 = vmul.f32 %v881, %v884
  %v888 = vadd.f32 %v874, %v886
  %v889 = vadd.f32 %v875, %v887
  %890 = vrot.lane.b32.xlu0 %v472, 111
  %v891 = vpop.permute.xlu0 %890
  %892 = vrot.lane.b32.xlu0 %v473, 111
  %v893 = vpop.permute.xlu0 %892
  %v894 = vsel %vm447, %v891, %v893
  %v895 = vsel %vm447, %v893, %v891
  %v896 = vmul.f32 %v894, %v872
  %v897 = vmul.f32 %v895, %v872
  %898 = vrot.lane.b32.xlu0 %v478, 111
  %v899 = vpop.permute.xlu0 %898
  %900 = vrot.lane.b32.xlu0 %v479, 111
  %v901 = vpop.permute.xlu0 %900
  %v902 = vsel %vm447, %v899, %v901
  %v903 = vsel %vm447, %v901, %v899
  %v904 = vmul.f32 %v902, %v884
  %v905 = vmul.f32 %v903, %v884
  %v906 = vadd.f32 %v896, %v904
  %v907 = vadd.f32 %v897, %v905
  %v908 = vmul.f32 %v888, %v123
  %v909 = vmul.f32 %v889, %v124
  %v910 = vmul.f32 %v906, %v123
  %v911 = vmul.f32 %v907, %v124
  %v912 = vadd.f32 %v860, %v908
  %v913 = vadd.f32 %v861, %v909
  %v914 = vadd.f32 %v862, %v910
  %v915 = vadd.f32 %v863, %v911
  %v916 = vadd.f32 %v912, 1e-16
  %v917 = vadd.f32 %v913, 1e-16
  %v918 = vmul.f32 %v199, %v916
  %v919 = vmul.f32 %v200, %v917
  %v920 = vadd.f32 %v914, 1e-16
  %v921 = vadd.f32 %v915, 1e-16
  %v922 = vrcp.pop %v920
  %v923 = vmul.f32 %v920, %v922
  %v924 = vsub.f32 1.0, %v923
  %v925 = vmul.f32 %v922, %v924
  %v926 = vadd.f32 %v922, %v925
  %vm927 = vweird.f32 %v920
  %vm928 = vweird.f32 %v922
  %vm929 = vmor %vm927, %vm928
  %v930 = vsel %vm929, %v922, %v926
  %v931 = vand.u32 2147483647, %v920
  %vm932 = vcmp.eq.f32.partialorder %v931, 8.507059e+37
  %v933 = vand.u32 %v920, 2147483648
  %v934 = vor.u32 1.1754944e-38, %v933
  %v935 = vsel %vm932, %v934, %v930
  %v936 = vmul.f32 %v918, %v935
  %v937 = vrcp.pop %v921
  %v938 = vmul.f32 %v921, %v937
  %v939 = vsub.f32 1.0, %v938
  %v940 = vmul.f32 %v937, %v939
  %v941 = vadd.f32 %v937, %v940
  %vm942 = vweird.f32 %v921
  %vm943 = vweird.f32 %v937
  %vm944 = vmor %vm942, %vm943
  %v945 = vsel %vm944, %v937, %v941
  %v946 = vand.u32 2147483647, %v921
  %vm947 = vcmp.eq.f32.partialorder %v946, 8.507059e+37
  %v948 = vand.u32 %v921, 2147483648
  %v949 = vor.u32 1.1754944e-38, %v948
  %v950 = vsel %vm947, %v949, %v945
  %v951 = vmul.f32 %v919, %v950
  %952 = vst [vmem:[%s3] sm:$0xff] %v936
  %953 = vst [vmem:[%s3 + $0x8] sm:$0xff] %v951
  // Predicated region
  $region14: #{_deconv_forward_impl.1} parent=0 // pred_check
    _
  $region15: #{_deconv_forward_impl.1} parent=0 // pred_check_branch
    %955 = sbr.rel (0) target = $region17
  $region16: #{_deconv_forward_impl.1} parent=0 // pred_region
    _
  $region17: #{_deconv_forward_impl.1} parent=0 // pred_fallthru
    _
  // Predicated region
  $region18: #{_deconv_forward_impl.1} parent=0 // pred_check
    _
  $region19: #{_deconv_forward_impl.1} parent=0 // pred_check_branch
    %957 = sbr.rel (0) target = $region21
  $region20: #{_deconv_forward_impl.1} parent=0 // pred_region
    _
  $region21: #{_deconv_forward_impl.1} parent=0 // pred_fallthru
    _

</llo_original>
